<compile_context>
chip_gen: v7x
topology: tpu7x:2x2x1
jax: 0.10.0
libtpu: 0.0.40
codegen_flags: <defaults>
</compile_context>

<pallas_src>
import functools

import jax
import jax.numpy as jnp
from jax.experimental import pallas as pl
from jax.experimental.pallas import tpu as pltpu


def _attention_kernel(x_ref, w_qkv_ref, w_out_ref, b_out_ref,
                      out_ref, k_ref, v_ref,
                      *, heads, compute_dtype, exact):
    """One grid step == one batch element.

    w_qkv_ref holds the per-head projection weights stacked on the leading
    (matmul-batch) axis as [K heads | V heads | Q heads * scale], so a single
    heads-batched einsum produces every projection exactly once.
    """
    x = x_ref[0].astype(compute_dtype)                     # (N, dim)
    n, dim = x.shape
    g = 3 * heads

    # ---- Single fused Q/K/V projection (heads-batched). --------------------
    # NOTE: the explicit broadcast is kept (instead of an un-batched
    # 'nd,hde->hne' einsum) because Mosaic's dot_general lowering wants
    # matching leading batch dims on both operands; it is a one-off copy of a
    # single (N, dim) tile, issued once per grid step (not in a loop).
    xb = jnp.broadcast_to(x[None], (g, n, dim))            # (3H, N, dim)
    qkv = jnp.einsum("hnd,hde->hne", xb, w_qkv_ref[...],
                     preferred_element_type=jnp.float32)   # (3H, N, dh) f32
    k_h = qkv[:heads]                                      # (H, N, dh)
    v_h = qkv[heads:2 * heads]                             # (H, N, dh)
    q_h = qkv[2 * heads:]                                  # scale pre-folded

    # ---- Emit K/V exactly as attended, already in module layout. -----------
    k_ref[0] = k_h.astype(k_ref.dtype)
    v_ref[0] = v_h.astype(v_ref.dtype)

    # ---- Scores + numerically stable softmax (statistics in f32). ----------
    s = jnp.einsum("hqe,hke->hqk",
                   q_h.astype(compute_dtype), k_h.astype(compute_dtype),
                   preferred_element_type=jnp.float32)     # (H, N, N)
    m = jnp.max(s, axis=-1, keepdims=True)
    p = jnp.exp(s - m)
    l = jnp.sum(p, axis=-1, keepdims=True)
    if exact:
        attn = p / l
    else:
        attn = p * pl.reciprocal(l, approx=True)

    # ---- Context and output projection. -------------------------------------
    ctx = jnp.einsum("hqk,hke->hqe",
                     attn.astype(compute_dtype), v_h.astype(compute_dtype),
                     preferred_element_type=jnp.float32)   # (H, N, dh)
    # Heads-batched output matmul + head reduction.  (A single 'hne,heo->no'
    # einsum would need a dot_general with two contracting dims, which the
    # Mosaic lowering does not accept; the (H, N, dim) f32 intermediate is a
    # few KiB at these shapes.)
    y_h = jnp.einsum("hne,heo->hno",
                     ctx.astype(compute_dtype), w_out_ref[...],
                     preferred_element_type=jnp.float32)   # (H, N, dim)
    y = jnp.sum(y_h, axis=0) + b_out_ref[...]              # (N, dim)
    out_ref[0] = y.astype(out_ref.dtype)


def attention_forward(x, w_qkv, w_out, b_out, *, heads, dim_head,
                      compute_dtype=jnp.float32):
    """x: (B, N, dim) -> (out (B,N,dim), k (B,H,N,dh), v (B,H,N,dh))."""
    B, N, dim = x.shape
    inner = heads * dim_head
    assert w_qkv.shape == (dim, 3 * inner)
    assert w_out.shape == (inner, dim)
    assert b_out.shape == (dim,)
    scale = dim_head ** (-0.5)
    exact = compute_dtype == jnp.float32

    # Split the fused QKV weight once in the wrapper and stack per-head
    # weights along the matmul-batch axis: [K heads | V heads | Q heads*scale].
    w_q = w_qkv[:, 0 * inner:1 * inner]
    w_k = w_qkv[:, 1 * inner:2 * inner]
    w_v = w_qkv[:, 2 * inner:3 * inner]

    def per_head(w):  # (dim, inner) -> (heads, dim, dim_head)
        return w.reshape(dim, heads, dim_head).transpose(1, 0, 2)

    w_stack = jnp.concatenate(
        [per_head(w_k), per_head(w_v), per_head(w_q) * scale],
        axis=0).astype(compute_dtype)                       # (3H, dim, dh)
    wo_h = w_out.reshape(heads, dim_head, dim).astype(compute_dtype)
    b2 = b_out.reshape(1, dim).astype(jnp.float32)

    kernel = functools.partial(_attention_kernel, heads=heads,
                               compute_dtype=compute_dtype, exact=exact)

    out_shapes = (
        jax.ShapeDtypeStruct((B, N, dim), x.dtype),
        jax.ShapeDtypeStruct((B, heads, N, dim_head), x.dtype),
        jax.ShapeDtypeStruct((B, heads, N, dim_head), x.dtype),
    )

    grid_spec = pltpu.PrefetchScalarGridSpec(
        num_scalar_prefetch=0,
        grid=(B,),
        in_specs=[
            pl.BlockSpec((1, N, dim), lambda b: (b, 0, 0)),
            pl.BlockSpec((3 * heads, dim, dim_head), lambda b: (0, 0, 0)),
            pl.BlockSpec((heads, dim_head, dim), lambda b: (0, 0, 0)),
            pl.BlockSpec((1, dim), lambda b: (0, 0)),
        ],
        out_specs=[
            pl.BlockSpec((1, N, dim), lambda b: (b, 0, 0)),
            pl.BlockSpec((1, heads, N, dim_head), lambda b: (b, 0, 0, 0)),
            pl.BlockSpec((1, heads, N, dim_head), lambda b: (b, 0, 0, 0)),
        ],
    )

    out, k, v = pl.pallas_call(
        kernel,
        out_shape=out_shapes,
        grid_spec=grid_spec,
        compiler_params=pltpu.CompilerParams(
            dimension_semantics=("parallel",)),
    )(x, w_stack, wo_h, b2)
    return out, k, v


def _reference(x, w_qkv, w_out, b_out, *, heads, dim_head):
    """Pure-JAX reference mirroring the PyTorch forward (high precision)."""
    B, N, dim = x.shape
    inner = heads * dim_head
    scale = dim_head ** (-0.5)
    hp = jax.lax.Precision.HIGHEST
    qkv = jnp.dot(x, w_qkv, precision=hp)
    q, k, v = jnp.split(qkv, 3, axis=-1)

    def to_heads(t):  # 'b n (h d) -> b h n d'
        return t.reshape(B, N, heads, dim_head).transpose(0, 2, 1, 3)

    q, k, v = map(to_heads, (q, k, v))
    dots = jnp.einsum("bhqd,bhkd->bhqk", q, k, precision=hp) * scale
    attn = jax.nn.softmax(dots, axis=-1)
    out = jnp.einsum("bhqk,bhkd->bhqd", attn, v, precision=hp)
    out = out.transpose(0, 2, 1, 3).reshape(B, N, inner)
    return jnp.dot(out, w_out, precision=hp) + b_out, k, v


if __name__ == "__main__":
    # Small shapes consistent with the module: dim=32, heads=4, dim_head=16.
    B, N, dim = 2, 8, 32
    heads, dim_head = 4, 16
    inner = heads * dim_head

    key = jax.random.PRNGKey(0)
    kx, kw1, kw2, kb = jax.random.split(key, 4)

    x = jax.random.normal(kx, (B, N, dim), dtype=jnp.float32)
    w_qkv = jax.random.uniform(kw1, (dim, 3 * inner), jnp.float32,
                               -dim ** -0.5, dim ** -0.5)
    w_out = jax.random.uniform(kw2, (inner, dim), jnp.float32,
                               -inner ** -0.5, inner ** -0.5)
    b_out = jax.random.uniform(kb, (dim,), jnp.float32,
                               -inner ** -0.5, inner ** -0.5)

    ref_out, ref_k, ref_v = _reference(x, w_qkv, w_out, b_out,
                                       heads=heads, dim_head=dim_head)

    # Exact-semantics path (f32 operands, true divide in softmax).
    out32, k32, v32 = attention_forward(x, w_qkv, w_out, b_out,
                                        heads=heads, dim_head=dim_head,
                                        compute_dtype=jnp.float32)
    jax.block_until_ready((out32, k32, v32))
    assert jnp.allclose(out32, ref_out, atol=2e-2, rtol=2e-2)
    assert jnp.allclose(k32, ref_k, atol=2e-2, rtol=2e-2)
    assert jnp.allclose(v32, ref_v, atol=2e-2, rtol=2e-2)

    # Fast path (bf16 MXU operands, f32 accumulation / softmax statistics).
    out16, k16, v16 = attention_forward(x, w_qkv, w_out, b_out,
                                        heads=heads, dim_head=dim_head,
                                        compute_dtype=jnp.bfloat16)
    jax.block_until_ready((out16, k16, v16))
    assert jnp.allclose(out16, ref_out, atol=5e-2, rtol=5e-2)
    assert jnp.allclose(k16, ref_k, atol=5e-2, rtol=5e-2)
    assert jnp.allclose(v16, ref_v, atol=5e-2, rtol=5e-2)

    print("KERNEL_OK")
</pallas_src>

<mosaic_0001>
module attributes {stable_mosaic.version = 11 : i64} {
  func.func @_attention_kernel(%arg0: i32, %arg1: memref<1x8x32xf32, #tpu.memory_space<vmem>>, %arg2: memref<12x32x16xf32, #tpu.memory_space<vmem>>, %arg3: memref<4x16x32xf32, #tpu.memory_space<vmem>>, %arg4: memref<1x32xf32, #tpu.memory_space<vmem>>, %arg5: memref<1x8x32xf32, #tpu.memory_space<vmem>>, %arg6: memref<1x4x8x16xf32, #tpu.memory_space<vmem>>, %arg7: memref<1x4x8x16xf32, #tpu.memory_space<vmem>>) attributes {dimension_semantics = [#tpu.dimension_semantics<parallel>], iteration_bounds = array<i64: 2>, scalar_prefetch = 0 : i64, scratch_operands = 0 : i64, tpu.core_type = #tpu.core_type<tc>, window_params = [{transform_indices = @transform_0, window_bounds = array<i64: 1, 8, 32>}, {pipeline_mode = #tpu.pipeline_mode<synchronous>, transform_indices = @transform_1, window_bounds = array<i64: 12, 32, 16>}, {pipeline_mode = #tpu.pipeline_mode<synchronous>, transform_indices = @transform_2, window_bounds = array<i64: 4, 16, 32>}, {pipeline_mode = #tpu.pipeline_mode<synchronous>, transform_indices = @transform_3, window_bounds = array<i64: 1, 32>}, {transform_indices = @transform_4, window_bounds = array<i64: 1, 8, 32>}, {transform_indices = @transform_5, window_bounds = array<i64: 1, 4, 8, 16>}, {transform_indices = @transform_6, window_bounds = array<i64: 1, 4, 8, 16>}]} {
    %c0 = arith.constant 0 : index
    %c0_0 = arith.constant 0 : index
    %c0_1 = arith.constant 0 : index
    %0 = vector.load %arg1[%c0, %c0_0, %c0_1] : memref<1x8x32xf32, #tpu.memory_space<vmem>>, vector<1x8x32xf32>
    %1 = vector.shape_cast %0 : vector<1x8x32xf32> to vector<8x32xf32>
    %2 = vector.shape_cast %1 : vector<8x32xf32> to vector<1x8x32xf32>
    %3 = vector.shape_cast %2 : vector<1x8x32xf32> to vector<1x8x32xf32>
    %4 = vector.broadcast %3 : vector<1x8x32xf32> to vector<12x8x32xf32>
    %c0_2 = arith.constant 0 : index
    %c0_3 = arith.constant 0 : index
    %c0_4 = arith.constant 0 : index
    %5 = vector.load %arg2[%c0_2, %c0_3, %c0_4] : memref<12x32x16xf32, #tpu.memory_space<vmem>>, vector<12x32x16xf32>
    "tpu.trace_start"() <{level = 10 : i32, message = "hnd,hde->hne"}> : () -> ()
    %cst = arith.constant dense<0.000000e+00> : vector<12x8x16xf32>
    %6 = tpu.matmul %4, %5, %cst {dimension_numbers = #tpu.dot_dimension_numbers<[2], [1], [1], [2], [0, 0, 0, 1, 1, 2], [0], [0]>} : vector<12x8x32xf32>, vector<12x32x16xf32>, vector<12x8x16xf32> -> vector<12x8x16xf32>
    "tpu.trace_stop"() : () -> ()
    %7 = vector.extract_strided_slice %6 {offsets = [0, 0, 0], sizes = [4, 8, 16], strides = [1, 1, 1]} : vector<12x8x16xf32> to vector<4x8x16xf32>
    %8 = vector.extract_strided_slice %6 {offsets = [4, 0, 0], sizes = [4, 8, 16], strides = [1, 1, 1]} : vector<12x8x16xf32> to vector<4x8x16xf32>
    %9 = vector.extract_strided_slice %6 {offsets = [8, 0, 0], sizes = [4, 8, 16], strides = [1, 1, 1]} : vector<12x8x16xf32> to vector<4x8x16xf32>
    %c0_5 = arith.constant 0 : index
    %c0_6 = arith.constant 0 : index
    %c0_7 = arith.constant 0 : index
    %c0_8 = arith.constant 0 : index
    %10 = vector.load %arg6[%c0_5, %c0_6, %c0_7, %c0_8] : memref<1x4x8x16xf32, #tpu.memory_space<vmem>>, vector<1x4x8x16xf32>
    %11 = vector.shape_cast %10 : vector<1x4x8x16xf32> to vector<4x8x16xf32>
    %12 = vector.shape_cast %7 : vector<4x8x16xf32> to vector<1x4x8x16xf32>
    tpu.vector_store %arg6[%c0_5, %c0_6, %c0_7, %c0_8], %12 {strides = array<i32>} : memref<1x4x8x16xf32, #tpu.memory_space<vmem>>, vector<1x4x8x16xf32>,
    %c0_9 = arith.constant 0 : index
    %c0_10 = arith.constant 0 : index
    %c0_11 = arith.constant 0 : index
    %c0_12 = arith.constant 0 : index
    %13 = vector.load %arg7[%c0_9, %c0_10, %c0_11, %c0_12] : memref<1x4x8x16xf32, #tpu.memory_space<vmem>>, vector<1x4x8x16xf32>
    %14 = vector.shape_cast %13 : vector<1x4x8x16xf32> to vector<4x8x16xf32>
    %15 = vector.shape_cast %8 : vector<4x8x16xf32> to vector<1x4x8x16xf32>
    tpu.vector_store %arg7[%c0_9, %c0_10, %c0_11, %c0_12], %15 {strides = array<i32>} : memref<1x4x8x16xf32, #tpu.memory_space<vmem>>, vector<1x4x8x16xf32>,
    "tpu.trace_start"() <{level = 10 : i32, message = "hqe,hke->hqk"}> : () -> ()
    %cst_13 = arith.constant dense<0.000000e+00> : vector<4x8x8xf32>
    %16 = tpu.matmul %9, %7, %cst_13 {dimension_numbers = #tpu.dot_dimension_numbers<[2], [2], [1], [1], [0, 0, 0, 1, 1, 1], [0], [0]>} : vector<4x8x16xf32>, vector<4x8x16xf32>, vector<4x8x8xf32> -> vector<4x8x8xf32>
    "tpu.trace_stop"() : () -> ()
    %cst_14 = arith.constant dense<0xFF800000> : vector<4x8xf32>
    %17 = vector.multi_reduction <maximumf>, %16, %cst_14 [2] : vector<4x8x8xf32> to vector<4x8xf32>
    %18 = vector.shape_cast %17 : vector<4x8xf32> to vector<4x8x1xf32>
    %19 = vector.broadcast %18 : vector<4x8x1xf32> to vector<4x8x8xf32>
    %20 = arith.subf %16, %19 : vector<4x8x8xf32>
    %21 = math.exp %20 : vector<4x8x8xf32>
    %cst_15 = arith.constant dense<0.000000e+00> : vector<4x8xf32>
    %22 = vector.multi_reduction <add>, %21, %cst_15 [2] : vector<4x8x8xf32> to vector<4x8xf32>
    %23 = vector.shape_cast %22 : vector<4x8xf32> to vector<4x8x1xf32>
    %24 = vector.broadcast %23 : vector<4x8x1xf32> to vector<4x8x8xf32>
    %25 = arith.divf %21, %24 : vector<4x8x8xf32>
    "tpu.trace_start"() <{level = 10 : i32, message = "hqk,hke->hqe"}> : () -> ()
    %cst_16 = arith.constant dense<0.000000e+00> : vector<4x8x16xf32>
    %26 = tpu.matmul %25, %8, %cst_16 {dimension_numbers = #tpu.dot_dimension_numbers<[2], [1], [1], [2], [0, 0, 0, 1, 1, 2], [0], [0]>} : vector<4x8x8xf32>, vector<4x8x16xf32>, vector<4x8x16xf32> -> vector<4x8x16xf32>
    "tpu.trace_stop"() : () -> ()
    %c0_17 = arith.constant 0 : index
    %c0_18 = arith.constant 0 : index
    %c0_19 = arith.constant 0 : index
    %27 = vector.load %arg3[%c0_17, %c0_18, %c0_19] : memref<4x16x32xf32, #tpu.memory_space<vmem>>, vector<4x16x32xf32>
    "tpu.trace_start"() <{level = 10 : i32, message = "hne,heo->hno"}> : () -> ()
    %cst_20 = arith.constant dense<0.000000e+00> : vector<4x8x32xf32>
    %28 = tpu.matmul %26, %27, %cst_20 {dimension_numbers = #tpu.dot_dimension_numbers<[2], [1], [1], [2], [0, 0, 0, 1, 1, 2], [0], [0]>} : vector<4x8x16xf32>, vector<4x16x32xf32>, vector<4x8x32xf32> -> vector<4x8x32xf32>
    "tpu.trace_stop"() : () -> ()
    %cst_21 = arith.constant dense<0.000000e+00> : vector<8x32xf32>
    %29 = vector.multi_reduction <add>, %28, %cst_21 [0] : vector<4x8x32xf32> to vector<8x32xf32>
    %c0_22 = arith.constant 0 : index
    %c0_23 = arith.constant 0 : index
    %30 = vector.load %arg4[%c0_22, %c0_23] : memref<1x32xf32, #tpu.memory_space<vmem>>, vector<1x32xf32>
    %31 = vector.broadcast %30 : vector<1x32xf32> to vector<8x32xf32>
    %32 = arith.addf %29, %31 : vector<8x32xf32>
    %c0_24 = arith.constant 0 : index
    %c0_25 = arith.constant 0 : index
    %c0_26 = arith.constant 0 : index
    %33 = vector.load %arg5[%c0_24, %c0_25, %c0_26] : memref<1x8x32xf32, #tpu.memory_space<vmem>>, vector<1x8x32xf32>
    %34 = vector.shape_cast %33 : vector<1x8x32xf32> to vector<8x32xf32>
    %35 = vector.shape_cast %32 : vector<8x32xf32> to vector<1x8x32xf32>
    tpu.vector_store %arg5[%c0_24, %c0_25, %c0_26], %35 {strides = array<i32>} : memref<1x8x32xf32, #tpu.memory_space<vmem>>, vector<1x8x32xf32>,
    return
  }
  func.func @transform_0(%arg0: i32) -> (i32, i32, i32) {
    %c0_i32 = arith.constant 0 : i32
    %c0_i32_0 = arith.constant 0 : i32
    %c0_i32_1 = arith.constant 0 : i32
    return %arg0, %c0_i32, %c0_i32_0 : i32, i32, i32
  }
  func.func @transform_1(%arg0: i32) -> (i32, i32, i32) {
    %c0_i32 = arith.constant 0 : i32
    %c0_i32_0 = arith.constant 0 : i32
    %c0_i32_1 = arith.constant 0 : i32
    %c0_i32_2 = arith.constant 0 : i32
    return %c0_i32, %c0_i32_0, %c0_i32_1 : i32, i32, i32
  }
  func.func @transform_2(%arg0: i32) -> (i32, i32, i32) {
    %c0_i32 = arith.constant 0 : i32
    %c0_i32_0 = arith.constant 0 : i32
    %c0_i32_1 = arith.constant 0 : i32
    %c0_i32_2 = arith.constant 0 : i32
    return %c0_i32, %c0_i32_0, %c0_i32_1 : i32, i32, i32
  }
  func.func @transform_3(%arg0: i32) -> (i32, i32) {
    %c0_i32 = arith.constant 0 : i32
    %c0_i32_0 = arith.constant 0 : i32
    %c0_i32_1 = arith.constant 0 : i32
    return %c0_i32, %c0_i32_0 : i32, i32
  }
  func.func @transform_4(%arg0: i32) -> (i32, i32, i32) {
    %c0_i32 = arith.constant 0 : i32
    %c0_i32_0 = arith.constant 0 : i32
    %c0_i32_1 = arith.constant 0 : i32
    return %arg0, %c0_i32, %c0_i32_0 : i32, i32, i32
  }
  func.func @transform_5(%arg0: i32) -> (i32, i32, i32, i32) {
    %c0_i32 = arith.constant 0 : i32
    %c0_i32_0 = arith.constant 0 : i32
    %c0_i32_1 = arith.constant 0 : i32
    %c0_i32_2 = arith.constant 0 : i32
    return %arg0, %c0_i32, %c0_i32_0, %c0_i32_1 : i32, i32, i32, i32
  }
  func.func @transform_6(%arg0: i32) -> (i32, i32, i32, i32) {
    %c0_i32 = arith.constant 0 : i32
    %c0_i32_0 = arith.constant 0 : i32
    %c0_i32_1 = arith.constant 0 : i32
    %c0_i32_2 = arith.constant 0 : i32
    return %arg0, %c0_i32, %c0_i32_0, %c0_i32_1 : i32, i32, i32, i32
  }
}

</mosaic_0001>

<llo_original>
// kernel: tpu_custom_call.1
$region0: #{tpu_custom_call.1}
  #allocation0 [shape = 'u32[]', space=smem, size = 0x4, offset = 0x4, fixed_abs, tag = 'smem constant byte address 0x4 - core index']
  #allocation1 [shape = 'u32[144,128]{1,0:T(1,128)}', space=vmem, size = 0x12000, scoped, tag = 'internal scratch']
  %s0 = inlined_call_operand.vmem [shape: f32[2,8,32], index: 0, kind: input, shape index: {}]
  %s1 = inlined_call_operand.vmem [shape: f32[12,32,16], index: 1, kind: input, shape index: {}]
  %s2 = inlined_call_operand.vmem [shape: f32[4,16,32], index: 2, kind: input, shape index: {}]
  %s3 = inlined_call_operand.vmem [shape: f32[1,32], index: 3, kind: input, shape index: {}]
  %s4 = inlined_call_operand.hbm [shape: f32[2,8,32], index: 4, kind: output, shape index: {0}]
  %s5 = inlined_call_operand.hbm [shape: f32[2,4,8,16], index: 5, kind: output, shape index: {1}]
  %s6 = inlined_call_operand.hbm [shape: f32[2,4,8,16], index: 6, kind: output, shape index: {2}]
  %7 = xla_tuple %s4, %s5, %s6
  %s8 = sld [smem:[#allocation0]]
  $region65: #{tpu_custom_call.1} parent=0
    _
  %s10 = ssub.s32 1, %s8
  %s11 = scalar_select 0, %s10, %s8
  $region1: #{tpu_custom_call.1} parent=0
    #allocation2 [shape = 'u8[8192]{0}', space=vmem, size = 0x2000, scoped, tag = 'output window, operand 0']
    #allocation3 [shape = 's32[2]{0}', space=sflag, size = 0x8, scoped, tag = 'scoped memory for tpu_custom_call.1']
    #allocation4 [shape = 'u8[32768]{0}', space=vmem, size = 0x8000, scoped, tag = 'output window, operand 1']
    #allocation5 [shape = 's32[2]{0}', space=sflag, size = 0x8, scoped, tag = 'scoped memory for tpu_custom_call.1']
    #allocation6 [shape = 'u8[32768]{0}', space=vmem, size = 0x8000, scoped, tag = 'output window, operand 2']
    %12 = vsyncpa [#allocation3], 0
    %s13 = scalar_lea.sflag [#allocation3], 1
    %14 = vsyncpa %s13, 0
    %15 = vsyncpa [#allocation5], 0
    %s16 = scalar_lea.sflag [#allocation5], 1
    %17 = vsyncpa %s16, 0
    loop: start=0, step=1, limit=4
    $region2: #{tpu_custom_call.1} parent=1 // loop_pre_header
      _
    $region3: #{tpu_custom_call.1} parent=1 // loop_header
      %s19 = sphi 0, %s23
      %p20 = scmp.ge.s32.totalorder %s19, 4
      %s29 = sphi 0, %s31
      %s32 = sphi 0, %s29
      %s33 = sphi 0, %s32
      %s49 = sphi 0, %s33
      %s53 = sphi 0, %s53
      %s55 = sphi 0, %s53
      %s56 = sphi 0, %s55
      %s70 = sphi 0, %s56
      %s74 = sphi 0, %s74
      %s76 = sphi 0, %s74
      %s77 = sphi 0, %s76
      %s91 = sphi 0, %s77
      %s95 = sphi 0, %s95
      %s97 = sphi 0, %s95
      %s98 = sphi 0, %s97
      %s112 = sphi 0, %s98
      %s118 = sphi 0, %s120
      %s121 = sphi 0, %s118
      %s122 = sphi 0, %s121
      %s138 = sphi 0, %s122
      %s144 = sphi 0, %s146
      %s147 = sphi 0, %s144
      %s148 = sphi 0, %s147
      %s164 = sphi 0, %s148
      %s170 = sphi 0, %s172
      %s173 = sphi 0, %s170
      %s174 = sphi 0, %s173
      %s190 = sphi 0, %s174
    $region4: #{tpu_custom_call.1} parent=1 // loop_header_branch
      %22 = sbr.rel (%p20) target = $region8
    $region5: #{tpu_custom_call.1} parent=1 // loop_body
      %s24 = ssub.s32 %s19, 1
      %s25 = ssub.s32 %s19, 2
      %s26 = sadd.s32 %s19, 1
      %s27 = ssub.s32 %s19, %s26
      %p28 = scmp.eq.s32.totalorder %s27, 0
      %s30 = sadd.s32 %s29, 1
      %s31 = scalar_select %p28, %s29, %s30
      %p34 = pneg %p28
      %p35 = scmp.eq.s32.totalorder %s19, 1
      %p36 = por %p34, %p35
      %p37 = scmp.ne.s32.totalorder %s29, %s32
      %p38 = scmp.eq.s32.totalorder %s19, 0
      %p39 = por %p37, %p38
      %p40 = scmp.ne.s32.totalorder %s29, %s32
      %p41 = scmp.eq.s32.totalorder %s24, 1
      %p42 = por %p40, %p41
      %p43 = scmp.ne.s32.totalorder %s32, %s33
      %p44 = scmp.eq.s32.totalorder %s24, 0
      %p45 = por %p43, %p44
      %p46 = scmp.ne.s32.totalorder %s32, %s33
      %p47 = scmp.eq.s32.totalorder %s25, 1
      %p48 = por %p46, %p47
      %p50 = scmp.ne.s32.totalorder %s33, %s49
      %p51 = scmp.eq.s32.totalorder %s25, 0
      %p52 = por %p50, %p51
      %s54 = sadd.s32 %s53, 1
      %p57 = scmp.eq.s32.totalorder %s19, 1
      %p58 = scmp.ne.s32.totalorder %s53, %s55
      %p59 = scmp.eq.s32.totalorder %s19, 0
      %p60 = por %p58, %p59
      %p61 = scmp.ne.s32.totalorder %s53, %s55
      %p62 = scmp.eq.s32.totalorder %s24, 1
      %p63 = por %p61, %p62
      %p64 = scmp.ne.s32.totalorder %s55, %s56
      %p65 = scmp.eq.s32.totalorder %s24, 0
      %p66 = por %p64, %p65
      %p67 = scmp.ne.s32.totalorder %s55, %s56
      %p68 = scmp.eq.s32.totalorder %s25, 1
      %p69 = por %p67, %p68
      %p71 = scmp.ne.s32.totalorder %s56, %s70
      %p72 = scmp.eq.s32.totalorder %s25, 0
      %p73 = por %p71, %p72
      %s75 = sadd.s32 %s74, 1
      %p78 = scmp.eq.s32.totalorder %s19, 1
      %p79 = scmp.ne.s32.totalorder %s74, %s76
      %p80 = scmp.eq.s32.totalorder %s19, 0
      %p81 = por %p79, %p80
      %p82 = scmp.ne.s32.totalorder %s74, %s76
      %p83 = scmp.eq.s32.totalorder %s24, 1
      %p84 = por %p82, %p83
      %p85 = scmp.ne.s32.totalorder %s76, %s77
      %p86 = scmp.eq.s32.totalorder %s24, 0
      %p87 = por %p85, %p86
      %p88 = scmp.ne.s32.totalorder %s76, %s77
      %p89 = scmp.eq.s32.totalorder %s25, 1
      %p90 = por %p88, %p89
      %p92 = scmp.ne.s32.totalorder %s77, %s91
      %p93 = scmp.eq.s32.totalorder %s25, 0
      %p94 = por %p92, %p93
      %s96 = sadd.s32 %s95, 1
      %p99 = scmp.eq.s32.totalorder %s19, 1
      %p100 = scmp.ne.s32.totalorder %s95, %s97
      %p101 = scmp.eq.s32.totalorder %s19, 0
      %p102 = por %p100, %p101
      %p103 = scmp.ne.s32.totalorder %s95, %s97
      %p104 = scmp.eq.s32.totalorder %s24, 1
      %p105 = por %p103, %p104
      %p106 = scmp.ne.s32.totalorder %s97, %s98
      %p107 = scmp.eq.s32.totalorder %s24, 0
      %p108 = por %p106, %p107
      %p109 = scmp.ne.s32.totalorder %s97, %s98
      %p110 = scmp.eq.s32.totalorder %s25, 1
      %p111 = por %p109, %p110
      %p113 = scmp.ne.s32.totalorder %s98, %s112
      %p114 = scmp.eq.s32.totalorder %s25, 0
      %p115 = por %p113, %p114
      %s116 = ssub.s32 %s19, %s26
      %p117 = scmp.eq.s32.totalorder %s116, 0
      %s119 = sadd.s32 %s118, 1
      %s120 = scalar_select %p117, %s118, %s119
      %p123 = pneg %p117
      %p124 = scmp.eq.s32.totalorder %s19, 1
      %p125 = por %p123, %p124
      %p126 = scmp.ne.s32.totalorder %s118, %s121
      %p127 = scmp.eq.s32.totalorder %s19, 0
      %p128 = por %p126, %p127
      %p129 = scmp.ne.s32.totalorder %s118, %s121
      %p130 = scmp.eq.s32.totalorder %s24, 1
      %p131 = por %p129, %p130
      %p132 = scmp.ne.s32.totalorder %s121, %s122
      %p133 = scmp.eq.s32.totalorder %s24, 0
      %p134 = por %p132, %p133
      %p135 = scmp.ne.s32.totalorder %s121, %s122
      %p136 = scmp.eq.s32.totalorder %s25, 1
      %p137 = por %p135, %p136
      %p139 = scmp.ne.s32.totalorder %s122, %s138
      %p140 = scmp.eq.s32.totalorder %s25, 0
      %p141 = por %p139, %p140
      %s142 = ssub.s32 %s19, %s26
      %p143 = scmp.eq.s32.totalorder %s142, 0
      %s145 = sadd.s32 %s144, 1
      %s146 = scalar_select %p143, %s144, %s145
      %p149 = pneg %p143
      %p150 = scmp.eq.s32.totalorder %s19, 1
      %p151 = por %p149, %p150
      %p152 = scmp.ne.s32.totalorder %s144, %s147
      %p153 = scmp.eq.s32.totalorder %s19, 0
      %p154 = por %p152, %p153
      %p155 = scmp.ne.s32.totalorder %s144, %s147
      %p156 = scmp.eq.s32.totalorder %s24, 1
      %p157 = por %p155, %p156
      %p158 = scmp.ne.s32.totalorder %s147, %s148
      %p159 = scmp.eq.s32.totalorder %s24, 0
      %p160 = por %p158, %p159
      %p161 = scmp.ne.s32.totalorder %s147, %s148
      %p162 = scmp.eq.s32.totalorder %s25, 1
      %p163 = por %p161, %p162
      %p165 = scmp.ne.s32.totalorder %s148, %s164
      %p166 = scmp.eq.s32.totalorder %s25, 0
      %p167 = por %p165, %p166
      %s168 = ssub.s32 %s19, %s26
      %p169 = scmp.eq.s32.totalorder %s168, 0
      %s171 = sadd.s32 %s170, 1
      %s172 = scalar_select %p169, %s170, %s171
      %p175 = pneg %p169
      %p176 = scmp.eq.s32.totalorder %s19, 1
      %p177 = por %p175, %p176
      %p178 = scmp.ne.s32.totalorder %s170, %s173
      %p179 = scmp.eq.s32.totalorder %s19, 0
      %p180 = por %p178, %p179
      %p181 = scmp.ne.s32.totalorder %s170, %s173
      %p182 = scmp.eq.s32.totalorder %s24, 1
      %p183 = por %p181, %p182
      %p184 = scmp.ne.s32.totalorder %s173, %s174
      %p185 = scmp.eq.s32.totalorder %s24, 0
      %p186 = por %p184, %p185
      %p187 = scmp.ne.s32.totalorder %s173, %s174
      %p188 = scmp.eq.s32.totalorder %s25, 1
      %p189 = por %p187, %p188
      %p191 = scmp.ne.s32.totalorder %s174, %s190
      %p192 = scmp.eq.s32.totalorder %s25, 0
      %p193 = por %p191, %p192
      %p194 = scmp.le.s32.totalorder 1, %s19
      %p195 = scmp.lt.s32.totalorder %s19, 3
      %p196 = pnand %p194, %p195
      %p197 = pneg %p196
      // Predicated region
      $region9: #{tpu_custom_call.1} parent=5 // pred_check
        _
      $region10: #{tpu_custom_call.1} parent=5 // pred_check_branch
        %199 = sbr.rel (%p196) target = $region12
      $region11: #{tpu_custom_call.1} parent=5 // pred_region
        %s200 = ssub.s32 %s19, 1
        // Predicated region
        $region13: #{tpu_custom_call.1} parent=11 // pred_check
          %p201 = pneg %p66
        $region14: #{tpu_custom_call.1} parent=11 // pred_check_branch
          %203 = sbr.rel (%p201) target = $region16
        $region15: #{tpu_custom_call.1} parent=11 // pred_region
          _
        $region16: #{tpu_custom_call.1} parent=11 // pred_fallthru
          _
        // Predicated region
        $region17: #{tpu_custom_call.1} parent=11 // pred_check
          %p204 = pneg %p87
        $region18: #{tpu_custom_call.1} parent=11 // pred_check_branch
          %206 = sbr.rel (%p204) target = $region20
        $region19: #{tpu_custom_call.1} parent=11 // pred_region
          _
        $region20: #{tpu_custom_call.1} parent=11 // pred_fallthru
          _
        // Predicated region
        $region21: #{tpu_custom_call.1} parent=11 // pred_check
          %p207 = pneg %p108
        $region22: #{tpu_custom_call.1} parent=11 // pred_check_branch
          %209 = sbr.rel (%p207) target = $region24
        $region23: #{tpu_custom_call.1} parent=11 // pred_region
          _
        $region24: #{tpu_custom_call.1} parent=11 // pred_fallthru
          _
      $region12: #{tpu_custom_call.1} parent=5 // pred_fallthru
        _
      %p210 = scmp.lt.s32.totalorder %s19, 2
      // Predicated region
      $region25: #{tpu_custom_call.1} parent=5 // pred_check
        %p211 = pneg %p210
      $region26: #{tpu_custom_call.1} parent=5 // pred_check_branch
        %213 = sbr.rel (%p211) target = $region28
      $region27: #{tpu_custom_call.1} parent=5 // pred_region
        // Predicated region
        $region29: #{tpu_custom_call.1} parent=27 // pred_check
          %p214 = pneg %p39
        $region30: #{tpu_custom_call.1} parent=27 // pred_check_branch
          %216 = sbr.rel (%p214) target = $region32
        $region31: #{tpu_custom_call.1} parent=27 // pred_region
          %p217 = scmp.lt.s32.totalorder %s19, 1
          %s218 = scalar_select %p217, %s19, 1
          %s219 = smul.addr %s218, 8
          %s220 = scalar_lea.vmem %s0, %s219
        $region32: #{tpu_custom_call.1} parent=27 // pred_fallthru
          _
      $region28: #{tpu_custom_call.1} parent=5 // pred_fallthru
        _
      %p221 = scmp.le.s32.totalorder 1, %s19
      %p222 = scmp.lt.s32.totalorder %s19, 3
      %p223 = pnand %p221, %p222
      %p224 = pneg %p223
      // Predicated region
      $region33: #{tpu_custom_call.1} parent=5 // pred_check
        _
      $region34: #{tpu_custom_call.1} parent=5 // pred_check_branch
        %226 = sbr.rel (%p223) target = $region36
      $region35: #{tpu_custom_call.1} parent=5 // pred_region
        %s227 = ssub.s32 %s19, 1
        %p228 = scmp.lt.s32.totalorder %s24, 1
        %s229 = scalar_select %p228, %s24, 1
        %s230 = smul.addr %s229, 8
        %s231 = scalar_lea.vmem %s0, %s230
        %p232 = pneg %p45
        %p233 = pneg %p42
        %p234 = pneg %p66
        %p235 = pneg %p63
        %p236 = pneg %p87
        %p237 = pneg %p84
        %p238 = pneg %p108
        %p239 = pneg %p105
        %p240 = pneg %p134
        %p241 = pneg %p131
        %s242 = sand.u32 %s121, 1
        %s243 = scalar_lea.sflag [#allocation3], %s242
        %s244 = sand.u32 %s121, 1
        %s245 = smul.addr %s244, 8
        %s246 = scalar_lea.vmem [#allocation2], %s245
        %p247 = pneg %p160
        %p248 = pneg %p157
        %s249 = sand.u32 %s24, 1
        %s250 = scalar_lea.sflag [#allocation5], %s249
        %s251 = sand.u32 %s147, 1
        %s252 = smul.addr %s251, 32
        %s253 = scalar_lea.vmem [#allocation4], %s252
        %p254 = pneg %p186
        %p255 = pneg %p183
        %s256 = sand.u32 %s24, 1
        %s257 = scalar_lea.sflag [#allocation5], %s256
        %s258 = sand.u32 %s173, 1
        %s259 = smul.addr %s258, 32
        %s260 = scalar_lea.vmem [#allocation6], %s259
        %p261 = scmp.lt.s32.totalorder %s24, 1
        %s262 = scalar_select %p261, %s24, 1
        %s263 = smul.addr %s262, 8
        %s264 = scalar_lea.vmem %s0, %s263
        %v265 = vld [vmem:[%s264] sm:$0xff]
        %v266 = vld [vmem:[%s1] sm:$0xff]
        %v267 = vld [vmem:[%s1 + $0x8] sm:$0xff]
        %v268 = vld [vmem:[%s1 + $0x10] sm:$0xff]
        %v269 = vld [vmem:[%s1 + $0x18] sm:$0xff]
        %v270 = vld [vmem:[%s1 + $0x20] sm:$0xff]
        %v271 = vld [vmem:[%s1 + $0x28] sm:$0xff]
        %v272 = vld [vmem:[%s1 + $0x30] sm:$0xff]
        %v273 = vld [vmem:[%s1 + $0x38] sm:$0xff]
        %v274 = vld [vmem:[%s1 + $0x40] sm:$0xff]
        %v275 = vld [vmem:[%s1 + $0x48] sm:$0xff]
        %v276 = vld [vmem:[%s1 + $0x50] sm:$0xff]
        %v277 = vld [vmem:[%s1 + $0x58] sm:$0xff]
        %v278 = vld [vmem:[%s1 + $0x60] sm:$0xff]
        %v279 = vld [vmem:[%s1 + $0x68] sm:$0xff]
        %v280 = vld [vmem:[%s1 + $0x70] sm:$0xff]
        %v281 = vld [vmem:[%s1 + $0x78] sm:$0xff]
        %v282 = vld [vmem:[%s1 + $0x80] sm:$0xff]
        %v283 = vld [vmem:[%s1 + $0x88] sm:$0xff]
        %v284 = vld [vmem:[%s1 + $0x90] sm:$0xff]
        %v285 = vld [vmem:[%s1 + $0x98] sm:$0xff]
        %v286 = vld [vmem:[%s1 + $0xa0] sm:$0xff]
        %v287 = vld [vmem:[%s1 + $0xa8] sm:$0xff]
        %v288 = vld [vmem:[%s1 + $0xb0] sm:$0xff]
        %v289 = vld [vmem:[%s1 + $0xb8] sm:$0xff]
        %v290 = vld [vmem:[%s1 + $0xc0] sm:$0xff]
        %v291 = vld [vmem:[%s1 + $0xc8] sm:$0xff]
        %v292 = vld [vmem:[%s1 + $0xd0] sm:$0xff]
        %v293 = vld [vmem:[%s1 + $0xd8] sm:$0xff]
        %v294 = vld [vmem:[%s1 + $0xe0] sm:$0xff]
        %v295 = vld [vmem:[%s1 + $0xe8] sm:$0xff]
        %v296 = vld [vmem:[%s1 + $0xf0] sm:$0xff]
        %v297 = vld [vmem:[%s1 + $0xf8] sm:$0xff]
        %v298 = vld [vmem:[%s1 + $0x100] sm:$0xff]
        %v299 = vld [vmem:[%s1 + $0x108] sm:$0xff]
        %v300 = vld [vmem:[%s1 + $0x110] sm:$0xff]
        %v301 = vld [vmem:[%s1 + $0x118] sm:$0xff]
        %v302 = vld [vmem:[%s1 + $0x120] sm:$0xff]
        %v303 = vld [vmem:[%s1 + $0x128] sm:$0xff]
        %v304 = vld [vmem:[%s1 + $0x130] sm:$0xff]
        %v305 = vld [vmem:[%s1 + $0x138] sm:$0xff]
        %v306 = vld [vmem:[%s1 + $0x140] sm:$0xff]
        %v307 = vld [vmem:[%s1 + $0x148] sm:$0xff]
        %v308 = vld [vmem:[%s1 + $0x150] sm:$0xff]
        %v309 = vld [vmem:[%s1 + $0x158] sm:$0xff]
        %v310 = vld [vmem:[%s1 + $0x160] sm:$0xff]
        %v311 = vld [vmem:[%s1 + $0x168] sm:$0xff]
        %v312 = vld [vmem:[%s1 + $0x170] sm:$0xff]
        %v313 = vld [vmem:[%s1 + $0x178] sm:$0xff]
        %vm314 = vcmask 261120
        %v316 = vsel %vm314, %v265, 0
        %318 = vmatprep.subr.mxu0 0.0
        %319 = vmatpush1.msra.mxu0 %v266
        %320 = vmatprep.subr.mxu0 0.0
        %321 = vmatpush1.msra.mxu0 %v267
        %322 = vmatprep.subr.mxu0 0.0
        %323 = vmatpush1.msra.mxu0 %v268
        %324 = vmatprep.subr.mxu0 0.0
        %325 = vmatpush1.msra.mxu0 %v269
        %326 = vmatprep.subr.mxu0 0.0
        %327 = vmatpush1.msra.mxu0 0.0
        %328 = vmatprep.subr.mxu0 0.0
        %329 = vmatpush1.msra.mxu0 0.0
        %330 = vmatprep.subr.mxu0 0.0
        %331 = vmatpush1.msra.mxu0 0.0
        %332 = vmatprep.subr.mxu0 0.0
        %333 = vmatpush1.msra.mxu0 0.0
        %334 = vmatprep.subr.mxu0 0.0
        %335 = vmatpush1.msra.mxu0 0.0
        %336 = vmatprep.subr.mxu0 0.0
        %337 = vmatpush1.msra.mxu0 0.0
        %338 = vmatprep.subr.mxu0 0.0
        %339 = vmatpush1.msra.mxu0 0.0
        %340 = vmatprep.subr.mxu0 0.0
        %341 = vmatpush1.msra.mxu0 0.0
        %342 = vmatprep.subr.mxu0 0.0
        %343 = vmatpush1.msra.mxu0 0.0
        %344 = vmatprep.subr.mxu0 0.0
        %345 = vmatpush1.msra.mxu0 0.0
        %346 = vmatprep.subr.mxu0 0.0
        %347 = vmatpush1.msra.mxu0 0.0
        %348 = vmatprep.subr.mxu0 0.0
        %349 = vmatpush1.msra.mxu0 0.0
        %350 = vmatprep.subr.mxu0 0.0
        %351 = vmatpush1.msra.mxu0 0.0
        %352 = vmatprep.subr.mxu0 0.0
        %353 = vmatpush1.msra.mxu0 0.0
        %354 = vmatprep.subr.mxu0 0.0
        %355 = vmatpush1.msra.mxu0 0.0
        %356 = vmatprep.subr.mxu0 0.0
        %357 = vmatpush1.msra.mxu0 0.0
        %358 = vmatprep.subr.mxu0 0.0
        %359 = vmatpush1.msra.mxu0 0.0
        %360 = vmatprep.subr.mxu0 0.0
        %361 = vmatpush1.msra.mxu0 0.0
        %362 = vmatprep.subr.mxu0 0.0
        %363 = vmatpush1.msra.mxu0 0.0
        %364 = vmatprep.subr.mxu0 0.0
        %365 = vmatpush1.msra.mxu0 0.0
        %366 = vmatprep.subr.mxu0 0.0
        %367 = vmatpush1.msra.mxu0 0.0
        %368 = vmatprep.subr.mxu0 0.0
        %369 = vmatpush1.msra.mxu0 0.0
        %370 = vmatprep.subr.mxu0 0.0
        %371 = vmatpush1.msra.mxu0 0.0
        %372 = vmatprep.subr.mxu0 0.0
        %373 = vmatpush1.msra.mxu0 0.0
        %374 = vmatprep.subr.mxu0 0.0
        %375 = vmatpush1.msra.mxu0 0.0
        %376 = vmatprep.subr.mxu0 0.0
        %377 = vmatpush1.msra.mxu0 0.0
        %378 = vmatprep.subr.mxu0 0.0
        %379 = vmatpush1.msra.mxu0 0.0
        %380 = vmatprep.subr.mxu0 0.0
        %381 = vmatpush1.msra.mxu0 0.0
        %382 = vmatprep.mubr.f32.mxu0 0.0
        %383 = vmatmul.mubr.f32.gmra.mrb[0].mxu0 %v316
        %v384 = vpop.f32.mrb[0].mxu0
        %v385 = vadd.f32 0.0, %v384
        %v386 = vpop.f32.mrb[0].mxu0
        %387 = vdwg.mxu0
        %388 = vmatprep.subr.mxu0 0.0
        %389 = vmatpush1.msra.mxu0 %v270
        %390 = vmatprep.subr.mxu0 0.0
        %391 = vmatpush1.msra.mxu0 %v271
        %392 = vmatprep.subr.mxu0 0.0
        %393 = vmatpush1.msra.mxu0 %v272
        %394 = vmatprep.subr.mxu0 0.0
        %395 = vmatpush1.msra.mxu0 %v273
        %396 = vmatprep.subr.mxu0 0.0
        %397 = vmatpush1.msra.mxu0 0.0
        %398 = vmatprep.subr.mxu0 0.0
        %399 = vmatpush1.msra.mxu0 0.0
        %400 = vmatprep.subr.mxu0 0.0
        %401 = vmatpush1.msra.mxu0 0.0
        %402 = vmatprep.subr.mxu0 0.0
        %403 = vmatpush1.msra.mxu0 0.0
        %404 = vmatprep.subr.mxu0 0.0
        %405 = vmatpush1.msra.mxu0 0.0
        %406 = vmatprep.subr.mxu0 0.0
        %407 = vmatpush1.msra.mxu0 0.0
        %408 = vmatprep.subr.mxu0 0.0
        %409 = vmatpush1.msra.mxu0 0.0
        %410 = vmatprep.subr.mxu0 0.0
        %411 = vmatpush1.msra.mxu0 0.0
        %412 = vmatprep.subr.mxu0 0.0
        %413 = vmatpush1.msra.mxu0 0.0
        %414 = vmatprep.subr.mxu0 0.0
        %415 = vmatpush1.msra.mxu0 0.0
        %416 = vmatprep.subr.mxu0 0.0
        %417 = vmatpush1.msra.mxu0 0.0
        %418 = vmatprep.subr.mxu0 0.0
        %419 = vmatpush1.msra.mxu0 0.0
        %420 = vmatprep.subr.mxu0 0.0
        %421 = vmatpush1.msra.mxu0 0.0
        %422 = vmatprep.subr.mxu0 0.0
        %423 = vmatpush1.msra.mxu0 0.0
        %424 = vmatprep.subr.mxu0 0.0
        %425 = vmatpush1.msra.mxu0 0.0
        %426 = vmatprep.subr.mxu0 0.0
        %427 = vmatpush1.msra.mxu0 0.0
        %428 = vmatprep.subr.mxu0 0.0
        %429 = vmatpush1.msra.mxu0 0.0
        %430 = vmatprep.subr.mxu0 0.0
        %431 = vmatpush1.msra.mxu0 0.0
        %432 = vmatprep.subr.mxu0 0.0
        %433 = vmatpush1.msra.mxu0 0.0
        %434 = vmatprep.subr.mxu0 0.0
        %435 = vmatpush1.msra.mxu0 0.0
        %436 = vmatprep.subr.mxu0 0.0
        %437 = vmatpush1.msra.mxu0 0.0
        %438 = vmatprep.subr.mxu0 0.0
        %439 = vmatpush1.msra.mxu0 0.0
        %440 = vmatprep.subr.mxu0 0.0
        %441 = vmatpush1.msra.mxu0 0.0
        %442 = vmatprep.subr.mxu0 0.0
        %443 = vmatpush1.msra.mxu0 0.0
        %444 = vmatprep.subr.mxu0 0.0
        %445 = vmatpush1.msra.mxu0 0.0
        %446 = vmatprep.subr.mxu0 0.0
        %447 = vmatpush1.msra.mxu0 0.0
        %448 = vmatprep.subr.mxu0 0.0
        %449 = vmatpush1.msra.mxu0 0.0
        %450 = vmatprep.subr.mxu0 0.0
        %451 = vmatpush1.msra.mxu0 0.0
        %452 = vmatprep.mubr.f32.mxu0 0.0
        %453 = vmatmul.mubr.f32.gmra.mrb[0].mxu0 %v316
        %v454 = vpop.f32.mrb[0].mxu0
        %v455 = vadd.f32 0.0, %v454
        %v456 = vpop.f32.mrb[0].mxu0
        %457 = vdwg.mxu0
        %458 = vmatprep.subr.mxu0 0.0
        %459 = vmatpush1.msra.mxu0 %v274
        %460 = vmatprep.subr.mxu0 0.0
        %461 = vmatpush1.msra.mxu0 %v275
        %462 = vmatprep.subr.mxu0 0.0
        %463 = vmatpush1.msra.mxu0 %v276
        %464 = vmatprep.subr.mxu0 0.0
        %465 = vmatpush1.msra.mxu0 %v277
        %466 = vmatprep.subr.mxu0 0.0
        %467 = vmatpush1.msra.mxu0 0.0
        %468 = vmatprep.subr.mxu0 0.0
        %469 = vmatpush1.msra.mxu0 0.0
        %470 = vmatprep.subr.mxu0 0.0
        %471 = vmatpush1.msra.mxu0 0.0
        %472 = vmatprep.subr.mxu0 0.0
        %473 = vmatpush1.msra.mxu0 0.0
        %474 = vmatprep.subr.mxu0 0.0
        %475 = vmatpush1.msra.mxu0 0.0
        %476 = vmatprep.subr.mxu0 0.0
        %477 = vmatpush1.msra.mxu0 0.0
        %478 = vmatprep.subr.mxu0 0.0
        %479 = vmatpush1.msra.mxu0 0.0
        %480 = vmatprep.subr.mxu0 0.0
        %481 = vmatpush1.msra.mxu0 0.0
        %482 = vmatprep.subr.mxu0 0.0
        %483 = vmatpush1.msra.mxu0 0.0
        %484 = vmatprep.subr.mxu0 0.0
        %485 = vmatpush1.msra.mxu0 0.0
        %486 = vmatprep.subr.mxu0 0.0
        %487 = vmatpush1.msra.mxu0 0.0
        %488 = vmatprep.subr.mxu0 0.0
        %489 = vmatpush1.msra.mxu0 0.0
        %490 = vmatprep.subr.mxu0 0.0
        %491 = vmatpush1.msra.mxu0 0.0
        %492 = vmatprep.subr.mxu0 0.0
        %493 = vmatpush1.msra.mxu0 0.0
        %494 = vmatprep.subr.mxu0 0.0
        %495 = vmatpush1.msra.mxu0 0.0
        %496 = vmatprep.subr.mxu0 0.0
        %497 = vmatpush1.msra.mxu0 0.0
        %498 = vmatprep.subr.mxu0 0.0
        %499 = vmatpush1.msra.mxu0 0.0
        %500 = vmatprep.subr.mxu0 0.0
        %501 = vmatpush1.msra.mxu0 0.0
        %502 = vmatprep.subr.mxu0 0.0
        %503 = vmatpush1.msra.mxu0 0.0
        %504 = vmatprep.subr.mxu0 0.0
        %505 = vmatpush1.msra.mxu0 0.0
        %506 = vmatprep.subr.mxu0 0.0
        %507 = vmatpush1.msra.mxu0 0.0
        %508 = vmatprep.subr.mxu0 0.0
        %509 = vmatpush1.msra.mxu0 0.0
        %510 = vmatprep.subr.mxu0 0.0
        %511 = vmatpush1.msra.mxu0 0.0
        %512 = vmatprep.subr.mxu0 0.0
        %513 = vmatpush1.msra.mxu0 0.0
        %514 = vmatprep.subr.mxu0 0.0
        %515 = vmatpush1.msra.mxu0 0.0
        %516 = vmatprep.subr.mxu0 0.0
        %517 = vmatpush1.msra.mxu0 0.0
        %518 = vmatprep.subr.mxu0 0.0
        %519 = vmatpush1.msra.mxu0 0.0
        %520 = vmatprep.subr.mxu0 0.0
        %521 = vmatpush1.msra.mxu0 0.0
        %522 = vmatprep.mubr.f32.mxu0 0.0
        %523 = vmatmul.mubr.f32.gmra.mrb[0].mxu0 %v316
        %v524 = vpop.f32.mrb[0].mxu0
        %v525 = vadd.f32 0.0, %v524
        %v526 = vpop.f32.mrb[0].mxu0
        %527 = vdwg.mxu0
        %528 = vmatprep.subr.mxu0 0.0
        %529 = vmatpush1.msra.mxu0 %v278
        %530 = vmatprep.subr.mxu0 0.0
        %531 = vmatpush1.msra.mxu0 %v279
        %532 = vmatprep.subr.mxu0 0.0
        %533 = vmatpush1.msra.mxu0 %v280
        %534 = vmatprep.subr.mxu0 0.0
        %535 = vmatpush1.msra.mxu0 %v281
        %536 = vmatprep.subr.mxu0 0.0
        %537 = vmatpush1.msra.mxu0 0.0
        %538 = vmatprep.subr.mxu0 0.0
        %539 = vmatpush1.msra.mxu0 0.0
        %540 = vmatprep.subr.mxu0 0.0
        %541 = vmatpush1.msra.mxu0 0.0
        %542 = vmatprep.subr.mxu0 0.0
        %543 = vmatpush1.msra.mxu0 0.0
        %544 = vmatprep.subr.mxu0 0.0
        %545 = vmatpush1.msra.mxu0 0.0
        %546 = vmatprep.subr.mxu0 0.0
        %547 = vmatpush1.msra.mxu0 0.0
        %548 = vmatprep.subr.mxu0 0.0
        %549 = vmatpush1.msra.mxu0 0.0
        %550 = vmatprep.subr.mxu0 0.0
        %551 = vmatpush1.msra.mxu0 0.0
        %552 = vmatprep.subr.mxu0 0.0
        %553 = vmatpush1.msra.mxu0 0.0
        %554 = vmatprep.subr.mxu0 0.0
        %555 = vmatpush1.msra.mxu0 0.0
        %556 = vmatprep.subr.mxu0 0.0
        %557 = vmatpush1.msra.mxu0 0.0
        %558 = vmatprep.subr.mxu0 0.0
        %559 = vmatpush1.msra.mxu0 0.0
        %560 = vmatprep.subr.mxu0 0.0
        %561 = vmatpush1.msra.mxu0 0.0
        %562 = vmatprep.subr.mxu0 0.0
        %563 = vmatpush1.msra.mxu0 0.0
        %564 = vmatprep.subr.mxu0 0.0
        %565 = vmatpush1.msra.mxu0 0.0
        %566 = vmatprep.subr.mxu0 0.0
        %567 = vmatpush1.msra.mxu0 0.0
        %568 = vmatprep.subr.mxu0 0.0
        %569 = vmatpush1.msra.mxu0 0.0
        %570 = vmatprep.subr.mxu0 0.0
        %571 = vmatpush1.msra.mxu0 0.0
        %572 = vmatprep.subr.mxu0 0.0
        %573 = vmatpush1.msra.mxu0 0.0
        %574 = vmatprep.subr.mxu0 0.0
        %575 = vmatpush1.msra.mxu0 0.0
        %576 = vmatprep.subr.mxu0 0.0
        %577 = vmatpush1.msra.mxu0 0.0
        %578 = vmatprep.subr.mxu0 0.0
        %579 = vmatpush1.msra.mxu0 0.0
        %580 = vmatprep.subr.mxu0 0.0
        %581 = vmatpush1.msra.mxu0 0.0
        %582 = vmatprep.subr.mxu0 0.0
        %583 = vmatpush1.msra.mxu0 0.0
        %584 = vmatprep.subr.mxu0 0.0
        %585 = vmatpush1.msra.mxu0 0.0
        %586 = vmatprep.subr.mxu0 0.0
        %587 = vmatpush1.msra.mxu0 0.0
        %588 = vmatprep.subr.mxu0 0.0
        %589 = vmatpush1.msra.mxu0 0.0
        %590 = vmatprep.subr.mxu0 0.0
        %591 = vmatpush1.msra.mxu0 0.0
        %592 = vmatprep.mubr.f32.mxu0 0.0
        %593 = vmatmul.mubr.f32.gmra.mrb[0].mxu0 %v316
        %v594 = vpop.f32.mrb[0].mxu0
        %v595 = vadd.f32 0.0, %v594
        %v596 = vpop.f32.mrb[0].mxu0
        %597 = vdwg.mxu0
        %598 = vmatprep.subr.mxu0 0.0
        %599 = vmatpush1.msra.mxu0 %v282
        %600 = vmatprep.subr.mxu0 0.0
        %601 = vmatpush1.msra.mxu0 %v283
        %602 = vmatprep.subr.mxu0 0.0
        %603 = vmatpush1.msra.mxu0 %v284
        %604 = vmatprep.subr.mxu0 0.0
        %605 = vmatpush1.msra.mxu0 %v285
        %606 = vmatprep.subr.mxu0 0.0
        %607 = vmatpush1.msra.mxu0 0.0
        %608 = vmatprep.subr.mxu0 0.0
        %609 = vmatpush1.msra.mxu0 0.0
        %610 = vmatprep.subr.mxu0 0.0
        %611 = vmatpush1.msra.mxu0 0.0
        %612 = vmatprep.subr.mxu0 0.0
        %613 = vmatpush1.msra.mxu0 0.0
        %614 = vmatprep.subr.mxu0 0.0
        %615 = vmatpush1.msra.mxu0 0.0
        %616 = vmatprep.subr.mxu0 0.0
        %617 = vmatpush1.msra.mxu0 0.0
        %618 = vmatprep.subr.mxu0 0.0
        %619 = vmatpush1.msra.mxu0 0.0
        %620 = vmatprep.subr.mxu0 0.0
        %621 = vmatpush1.msra.mxu0 0.0
        %622 = vmatprep.subr.mxu0 0.0
        %623 = vmatpush1.msra.mxu0 0.0
        %624 = vmatprep.subr.mxu0 0.0
        %625 = vmatpush1.msra.mxu0 0.0
        %626 = vmatprep.subr.mxu0 0.0
        %627 = vmatpush1.msra.mxu0 0.0
        %628 = vmatprep.subr.mxu0 0.0
        %629 = vmatpush1.msra.mxu0 0.0
        %630 = vmatprep.subr.mxu0 0.0
        %631 = vmatpush1.msra.mxu0 0.0
        %632 = vmatprep.subr.mxu0 0.0
        %633 = vmatpush1.msra.mxu0 0.0
        %634 = vmatprep.subr.mxu0 0.0
        %635 = vmatpush1.msra.mxu0 0.0
        %636 = vmatprep.subr.mxu0 0.0
        %637 = vmatpush1.msra.mxu0 0.0
        %638 = vmatprep.subr.mxu0 0.0
        %639 = vmatpush1.msra.mxu0 0.0
        %640 = vmatprep.subr.mxu0 0.0
        %641 = vmatpush1.msra.mxu0 0.0
        %642 = vmatprep.subr.mxu0 0.0
        %643 = vmatpush1.msra.mxu0 0.0
        %644 = vmatprep.subr.mxu0 0.0
        %645 = vmatpush1.msra.mxu0 0.0
        %646 = vmatprep.subr.mxu0 0.0
        %647 = vmatpush1.msra.mxu0 0.0
        %648 = vmatprep.subr.mxu0 0.0
        %649 = vmatpush1.msra.mxu0 0.0
        %650 = vmatprep.subr.mxu0 0.0
        %651 = vmatpush1.msra.mxu0 0.0
        %652 = vmatprep.subr.mxu0 0.0
        %653 = vmatpush1.msra.mxu0 0.0
        %654 = vmatprep.subr.mxu0 0.0
        %655 = vmatpush1.msra.mxu0 0.0
        %656 = vmatprep.subr.mxu0 0.0
        %657 = vmatpush1.msra.mxu0 0.0
        %658 = vmatprep.subr.mxu0 0.0
        %659 = vmatpush1.msra.mxu0 0.0
        %660 = vmatprep.subr.mxu0 0.0
        %661 = vmatpush1.msra.mxu0 0.0
        %662 = vmatprep.mubr.f32.mxu0 0.0
        %663 = vmatmul.mubr.f32.gmra.mrb[0].mxu0 %v316
        %v664 = vpop.f32.mrb[0].mxu0
        %v665 = vadd.f32 0.0, %v664
        %v666 = vpop.f32.mrb[0].mxu0
        %667 = vdwg.mxu0
        %668 = vmatprep.subr.mxu0 0.0
        %669 = vmatpush1.msra.mxu0 %v286
        %670 = vmatprep.subr.mxu0 0.0
        %671 = vmatpush1.msra.mxu0 %v287
        %672 = vmatprep.subr.mxu0 0.0
        %673 = vmatpush1.msra.mxu0 %v288
        %674 = vmatprep.subr.mxu0 0.0
        %675 = vmatpush1.msra.mxu0 %v289
        %676 = vmatprep.subr.mxu0 0.0
        %677 = vmatpush1.msra.mxu0 0.0
        %678 = vmatprep.subr.mxu0 0.0
        %679 = vmatpush1.msra.mxu0 0.0
        %680 = vmatprep.subr.mxu0 0.0
        %681 = vmatpush1.msra.mxu0 0.0
        %682 = vmatprep.subr.mxu0 0.0
        %683 = vmatpush1.msra.mxu0 0.0
        %684 = vmatprep.subr.mxu0 0.0
        %685 = vmatpush1.msra.mxu0 0.0
        %686 = vmatprep.subr.mxu0 0.0
        %687 = vmatpush1.msra.mxu0 0.0
        %688 = vmatprep.subr.mxu0 0.0
        %689 = vmatpush1.msra.mxu0 0.0
        %690 = vmatprep.subr.mxu0 0.0
        %691 = vmatpush1.msra.mxu0 0.0
        %692 = vmatprep.subr.mxu0 0.0
        %693 = vmatpush1.msra.mxu0 0.0
        %694 = vmatprep.subr.mxu0 0.0
        %695 = vmatpush1.msra.mxu0 0.0
        %696 = vmatprep.subr.mxu0 0.0
        %697 = vmatpush1.msra.mxu0 0.0
        %698 = vmatprep.subr.mxu0 0.0
        %699 = vmatpush1.msra.mxu0 0.0
        %700 = vmatprep.subr.mxu0 0.0
        %701 = vmatpush1.msra.mxu0 0.0
        %702 = vmatprep.subr.mxu0 0.0
        %703 = vmatpush1.msra.mxu0 0.0
        %704 = vmatprep.subr.mxu0 0.0
        %705 = vmatpush1.msra.mxu0 0.0
        %706 = vmatprep.subr.mxu0 0.0
        %707 = vmatpush1.msra.mxu0 0.0
        %708 = vmatprep.subr.mxu0 0.0
        %709 = vmatpush1.msra.mxu0 0.0
        %710 = vmatprep.subr.mxu0 0.0
        %711 = vmatpush1.msra.mxu0 0.0
        %712 = vmatprep.subr.mxu0 0.0
        %713 = vmatpush1.msra.mxu0 0.0
        %714 = vmatprep.subr.mxu0 0.0
        %715 = vmatpush1.msra.mxu0 0.0
        %716 = vmatprep.subr.mxu0 0.0
        %717 = vmatpush1.msra.mxu0 0.0
        %718 = vmatprep.subr.mxu0 0.0
        %719 = vmatpush1.msra.mxu0 0.0
        %720 = vmatprep.subr.mxu0 0.0
        %721 = vmatpush1.msra.mxu0 0.0
        %722 = vmatprep.subr.mxu0 0.0
        %723 = vmatpush1.msra.mxu0 0.0
        %724 = vmatprep.subr.mxu0 0.0
        %725 = vmatpush1.msra.mxu0 0.0
        %726 = vmatprep.subr.mxu0 0.0
        %727 = vmatpush1.msra.mxu0 0.0
        %728 = vmatprep.subr.mxu0 0.0
        %729 = vmatpush1.msra.mxu0 0.0
        %730 = vmatprep.subr.mxu0 0.0
        %731 = vmatpush1.msra.mxu0 0.0
        %732 = vmatprep.mubr.f32.mxu0 0.0
        %733 = vmatmul.mubr.f32.gmra.mrb[0].mxu0 %v316
        %v734 = vpop.f32.mrb[0].mxu0
        %v735 = vadd.f32 0.0, %v734
        %v736 = vpop.f32.mrb[0].mxu0
        %737 = vdwg.mxu0
        %738 = vmatprep.subr.mxu0 0.0
        %739 = vmatpush1.msra.mxu0 %v290
        %740 = vmatprep.subr.mxu0 0.0
        %741 = vmatpush1.msra.mxu0 %v291
        %742 = vmatprep.subr.mxu0 0.0
        %743 = vmatpush1.msra.mxu0 %v292
        %744 = vmatprep.subr.mxu0 0.0
        %745 = vmatpush1.msra.mxu0 %v293
        %746 = vmatprep.subr.mxu0 0.0
        %747 = vmatpush1.msra.mxu0 0.0
        %748 = vmatprep.subr.mxu0 0.0
        %749 = vmatpush1.msra.mxu0 0.0
        %750 = vmatprep.subr.mxu0 0.0
        %751 = vmatpush1.msra.mxu0 0.0
        %752 = vmatprep.subr.mxu0 0.0
        %753 = vmatpush1.msra.mxu0 0.0
        %754 = vmatprep.subr.mxu0 0.0
        %755 = vmatpush1.msra.mxu0 0.0
        %756 = vmatprep.subr.mxu0 0.0
        %757 = vmatpush1.msra.mxu0 0.0
        %758 = vmatprep.subr.mxu0 0.0
        %759 = vmatpush1.msra.mxu0 0.0
        %760 = vmatprep.subr.mxu0 0.0
        %761 = vmatpush1.msra.mxu0 0.0
        %762 = vmatprep.subr.mxu0 0.0
        %763 = vmatpush1.msra.mxu0 0.0
        %764 = vmatprep.subr.mxu0 0.0
        %765 = vmatpush1.msra.mxu0 0.0
        %766 = vmatprep.subr.mxu0 0.0
        %767 = vmatpush1.msra.mxu0 0.0
        %768 = vmatprep.subr.mxu0 0.0
        %769 = vmatpush1.msra.mxu0 0.0
        %770 = vmatprep.subr.mxu0 0.0
        %771 = vmatpush1.msra.mxu0 0.0
        %772 = vmatprep.subr.mxu0 0.0
        %773 = vmatpush1.msra.mxu0 0.0
        %774 = vmatprep.subr.mxu0 0.0
        %775 = vmatpush1.msra.mxu0 0.0
        %776 = vmatprep.subr.mxu0 0.0
        %777 = vmatpush1.msra.mxu0 0.0
        %778 = vmatprep.subr.mxu0 0.0
        %779 = vmatpush1.msra.mxu0 0.0
        %780 = vmatprep.subr.mxu0 0.0
        %781 = vmatpush1.msra.mxu0 0.0
        %782 = vmatprep.subr.mxu0 0.0
        %783 = vmatpush1.msra.mxu0 0.0
        %784 = vmatprep.subr.mxu0 0.0
        %785 = vmatpush1.msra.mxu0 0.0
        %786 = vmatprep.subr.mxu0 0.0
        %787 = vmatpush1.msra.mxu0 0.0
        %788 = vmatprep.subr.mxu0 0.0
        %789 = vmatpush1.msra.mxu0 0.0
        %790 = vmatprep.subr.mxu0 0.0
        %791 = vmatpush1.msra.mxu0 0.0
        %792 = vmatprep.subr.mxu0 0.0
        %793 = vmatpush1.msra.mxu0 0.0
        %794 = vmatprep.subr.mxu0 0.0
        %795 = vmatpush1.msra.mxu0 0.0
        %796 = vmatprep.subr.mxu0 0.0
        %797 = vmatpush1.msra.mxu0 0.0
        %798 = vmatprep.subr.mxu0 0.0
        %799 = vmatpush1.msra.mxu0 0.0
        %800 = vmatprep.subr.mxu0 0.0
        %801 = vmatpush1.msra.mxu0 0.0
        %802 = vmatprep.mubr.f32.mxu0 0.0
        %803 = vmatmul.mubr.f32.gmra.mrb[0].mxu0 %v316
        %v804 = vpop.f32.mrb[0].mxu0
        %v805 = vadd.f32 0.0, %v804
        %v806 = vpop.f32.mrb[0].mxu0
        %807 = vdwg.mxu0
        %808 = vmatprep.subr.mxu0 0.0
        %809 = vmatpush1.msra.mxu0 %v294
        %810 = vmatprep.subr.mxu0 0.0
        %811 = vmatpush1.msra.mxu0 %v295
        %812 = vmatprep.subr.mxu0 0.0
        %813 = vmatpush1.msra.mxu0 %v296
        %814 = vmatprep.subr.mxu0 0.0
        %815 = vmatpush1.msra.mxu0 %v297
        %816 = vmatprep.subr.mxu0 0.0
        %817 = vmatpush1.msra.mxu0 0.0
        %818 = vmatprep.subr.mxu0 0.0
        %819 = vmatpush1.msra.mxu0 0.0
        %820 = vmatprep.subr.mxu0 0.0
        %821 = vmatpush1.msra.mxu0 0.0
        %822 = vmatprep.subr.mxu0 0.0
        %823 = vmatpush1.msra.mxu0 0.0
        %824 = vmatprep.subr.mxu0 0.0
        %825 = vmatpush1.msra.mxu0 0.0
        %826 = vmatprep.subr.mxu0 0.0
        %827 = vmatpush1.msra.mxu0 0.0
        %828 = vmatprep.subr.mxu0 0.0
        %829 = vmatpush1.msra.mxu0 0.0
        %830 = vmatprep.subr.mxu0 0.0
        %831 = vmatpush1.msra.mxu0 0.0
        %832 = vmatprep.subr.mxu0 0.0
        %833 = vmatpush1.msra.mxu0 0.0
        %834 = vmatprep.subr.mxu0 0.0
        %835 = vmatpush1.msra.mxu0 0.0
        %836 = vmatprep.subr.mxu0 0.0
        %837 = vmatpush1.msra.mxu0 0.0
        %838 = vmatprep.subr.mxu0 0.0
        %839 = vmatpush1.msra.mxu0 0.0
        %840 = vmatprep.subr.mxu0 0.0
        %841 = vmatpush1.msra.mxu0 0.0
        %842 = vmatprep.subr.mxu0 0.0
        %843 = vmatpush1.msra.mxu0 0.0
        %844 = vmatprep.subr.mxu0 0.0
        %845 = vmatpush1.msra.mxu0 0.0
        %846 = vmatprep.subr.mxu0 0.0
        %847 = vmatpush1.msra.mxu0 0.0
        %848 = vmatprep.subr.mxu0 0.0
        %849 = vmatpush1.msra.mxu0 0.0
        %850 = vmatprep.subr.mxu0 0.0
        %851 = vmatpush1.msra.mxu0 0.0
        %852 = vmatprep.subr.mxu0 0.0
        %853 = vmatpush1.msra.mxu0 0.0
        %854 = vmatprep.subr.mxu0 0.0
        %855 = vmatpush1.msra.mxu0 0.0
        %856 = vmatprep.subr.mxu0 0.0
        %857 = vmatpush1.msra.mxu0 0.0
        %858 = vmatprep.subr.mxu0 0.0
        %859 = vmatpush1.msra.mxu0 0.0
        %860 = vmatprep.subr.mxu0 0.0
        %861 = vmatpush1.msra.mxu0 0.0
        %862 = vmatprep.subr.mxu0 0.0
        %863 = vmatpush1.msra.mxu0 0.0
        %864 = vmatprep.subr.mxu0 0.0
        %865 = vmatpush1.msra.mxu0 0.0
        %866 = vmatprep.subr.mxu0 0.0
        %867 = vmatpush1.msra.mxu0 0.0
        %868 = vmatprep.subr.mxu0 0.0
        %869 = vmatpush1.msra.mxu0 0.0
        %870 = vmatprep.subr.mxu0 0.0
        %871 = vmatpush1.msra.mxu0 0.0
        %872 = vmatprep.mubr.f32.mxu0 0.0
        %873 = vmatmul.mubr.f32.gmra.mrb[0].mxu0 %v316
        %v874 = vpop.f32.mrb[0].mxu0
        %v875 = vadd.f32 0.0, %v874
        %v876 = vpop.f32.mrb[0].mxu0
        %877 = vdwg.mxu0
        %878 = vmatprep.subr.mxu0 0.0
        %879 = vmatpush1.msra.mxu0 %v298
        %880 = vmatprep.subr.mxu0 0.0
        %881 = vmatpush1.msra.mxu0 %v299
        %882 = vmatprep.subr.mxu0 0.0
        %883 = vmatpush1.msra.mxu0 %v300
        %884 = vmatprep.subr.mxu0 0.0
        %885 = vmatpush1.msra.mxu0 %v301
        %886 = vmatprep.subr.mxu0 0.0
        %887 = vmatpush1.msra.mxu0 0.0
        %888 = vmatprep.subr.mxu0 0.0
        %889 = vmatpush1.msra.mxu0 0.0
        %890 = vmatprep.subr.mxu0 0.0
        %891 = vmatpush1.msra.mxu0 0.0
        %892 = vmatprep.subr.mxu0 0.0
        %893 = vmatpush1.msra.mxu0 0.0
        %894 = vmatprep.subr.mxu0 0.0
        %895 = vmatpush1.msra.mxu0 0.0
        %896 = vmatprep.subr.mxu0 0.0
        %897 = vmatpush1.msra.mxu0 0.0
        %898 = vmatprep.subr.mxu0 0.0
        %899 = vmatpush1.msra.mxu0 0.0
        %900 = vmatprep.subr.mxu0 0.0
        %901 = vmatpush1.msra.mxu0 0.0
        %902 = vmatprep.subr.mxu0 0.0
        %903 = vmatpush1.msra.mxu0 0.0
        %904 = vmatprep.subr.mxu0 0.0
        %905 = vmatpush1.msra.mxu0 0.0
        %906 = vmatprep.subr.mxu0 0.0
        %907 = vmatpush1.msra.mxu0 0.0
        %908 = vmatprep.subr.mxu0 0.0
        %909 = vmatpush1.msra.mxu0 0.0
        %910 = vmatprep.subr.mxu0 0.0
        %911 = vmatpush1.msra.mxu0 0.0
        %912 = vmatprep.subr.mxu0 0.0
        %913 = vmatpush1.msra.mxu0 0.0
        %914 = vmatprep.subr.mxu0 0.0
        %915 = vmatpush1.msra.mxu0 0.0
        %916 = vmatprep.subr.mxu0 0.0
        %917 = vmatpush1.msra.mxu0 0.0
        %918 = vmatprep.subr.mxu0 0.0
        %919 = vmatpush1.msra.mxu0 0.0
        %920 = vmatprep.subr.mxu0 0.0
        %921 = vmatpush1.msra.mxu0 0.0
        %922 = vmatprep.subr.mxu0 0.0
        %923 = vmatpush1.msra.mxu0 0.0
        %924 = vmatprep.subr.mxu0 0.0
        %925 = vmatpush1.msra.mxu0 0.0
        %926 = vmatprep.subr.mxu0 0.0
        %927 = vmatpush1.msra.mxu0 0.0
        %928 = vmatprep.subr.mxu0 0.0
        %929 = vmatpush1.msra.mxu0 0.0
        %930 = vmatprep.subr.mxu0 0.0
        %931 = vmatpush1.msra.mxu0 0.0
        %932 = vmatprep.subr.mxu0 0.0
        %933 = vmatpush1.msra.mxu0 0.0
        %934 = vmatprep.subr.mxu0 0.0
        %935 = vmatpush1.msra.mxu0 0.0
        %936 = vmatprep.subr.mxu0 0.0
        %937 = vmatpush1.msra.mxu0 0.0
        %938 = vmatprep.subr.mxu0 0.0
        %939 = vmatpush1.msra.mxu0 0.0
        %940 = vmatprep.subr.mxu0 0.0
        %941 = vmatpush1.msra.mxu0 0.0
        %942 = vmatprep.mubr.f32.mxu0 0.0
        %943 = vmatmul.mubr.f32.gmra.mrb[0].mxu0 %v316
        %v944 = vpop.f32.mrb[0].mxu0
        %v945 = vadd.f32 0.0, %v944
        %v946 = vpop.f32.mrb[0].mxu0
        %947 = vdwg.mxu0
        %948 = vmatprep.subr.mxu0 0.0
        %949 = vmatpush1.msra.mxu0 %v302
        %950 = vmatprep.subr.mxu0 0.0
        %951 = vmatpush1.msra.mxu0 %v303
        %952 = vmatprep.subr.mxu0 0.0
        %953 = vmatpush1.msra.mxu0 %v304
        %954 = vmatprep.subr.mxu0 0.0
        %955 = vmatpush1.msra.mxu0 %v305
        %956 = vmatprep.subr.mxu0 0.0
        %957 = vmatpush1.msra.mxu0 0.0
        %958 = vmatprep.subr.mxu0 0.0
        %959 = vmatpush1.msra.mxu0 0.0
        %960 = vmatprep.subr.mxu0 0.0
        %961 = vmatpush1.msra.mxu0 0.0
        %962 = vmatprep.subr.mxu0 0.0
        %963 = vmatpush1.msra.mxu0 0.0
        %964 = vmatprep.subr.mxu0 0.0
        %965 = vmatpush1.msra.mxu0 0.0
        %966 = vmatprep.subr.mxu0 0.0
        %967 = vmatpush1.msra.mxu0 0.0
        %968 = vmatprep.subr.mxu0 0.0
        %969 = vmatpush1.msra.mxu0 0.0
        %970 = vmatprep.subr.mxu0 0.0
        %971 = vmatpush1.msra.mxu0 0.0
        %972 = vmatprep.subr.mxu0 0.0
        %973 = vmatpush1.msra.mxu0 0.0
        %974 = vmatprep.subr.mxu0 0.0
        %975 = vmatpush1.msra.mxu0 0.0
        %976 = vmatprep.subr.mxu0 0.0
        %977 = vmatpush1.msra.mxu0 0.0
        %978 = vmatprep.subr.mxu0 0.0
        %979 = vmatpush1.msra.mxu0 0.0
        %980 = vmatprep.subr.mxu0 0.0
        %981 = vmatpush1.msra.mxu0 0.0
        %982 = vmatprep.subr.mxu0 0.0
        %983 = vmatpush1.msra.mxu0 0.0
        %984 = vmatprep.subr.mxu0 0.0
        %985 = vmatpush1.msra.mxu0 0.0
        %986 = vmatprep.subr.mxu0 0.0
        %987 = vmatpush1.msra.mxu0 0.0
        %988 = vmatprep.subr.mxu0 0.0
        %989 = vmatpush1.msra.mxu0 0.0
        %990 = vmatprep.subr.mxu0 0.0
        %991 = vmatpush1.msra.mxu0 0.0
        %992 = vmatprep.subr.mxu0 0.0
        %993 = vmatpush1.msra.mxu0 0.0
        %994 = vmatprep.subr.mxu0 0.0
        %995 = vmatpush1.msra.mxu0 0.0
        %996 = vmatprep.subr.mxu0 0.0
        %997 = vmatpush1.msra.mxu0 0.0
        %998 = vmatprep.subr.mxu0 0.0
        %999 = vmatpush1.msra.mxu0 0.0
        %1000 = vmatprep.subr.mxu0 0.0
        %1001 = vmatpush1.msra.mxu0 0.0
        %1002 = vmatprep.subr.mxu0 0.0
        %1003 = vmatpush1.msra.mxu0 0.0
        %1004 = vmatprep.subr.mxu0 0.0
        %1005 = vmatpush1.msra.mxu0 0.0
        %1006 = vmatprep.subr.mxu0 0.0
        %1007 = vmatpush1.msra.mxu0 0.0
        %1008 = vmatprep.subr.mxu0 0.0
        %1009 = vmatpush1.msra.mxu0 0.0
        %1010 = vmatprep.subr.mxu0 0.0
        %1011 = vmatpush1.msra.mxu0 0.0
        %1012 = vmatprep.mubr.f32.mxu0 0.0
        %1013 = vmatmul.mubr.f32.gmra.mrb[0].mxu0 %v316
        %v1014 = vpop.f32.mrb[0].mxu0
        %v1015 = vadd.f32 0.0, %v1014
        %v1016 = vpop.f32.mrb[0].mxu0
        %1017 = vdwg.mxu0
        %1018 = vmatprep.subr.mxu0 0.0
        %1019 = vmatpush1.msra.mxu0 %v306
        %1020 = vmatprep.subr.mxu0 0.0
        %1021 = vmatpush1.msra.mxu0 %v307
        %1022 = vmatprep.subr.mxu0 0.0
        %1023 = vmatpush1.msra.mxu0 %v308
        %1024 = vmatprep.subr.mxu0 0.0
        %1025 = vmatpush1.msra.mxu0 %v309
        %1026 = vmatprep.subr.mxu0 0.0
        %1027 = vmatpush1.msra.mxu0 0.0
        %1028 = vmatprep.subr.mxu0 0.0
        %1029 = vmatpush1.msra.mxu0 0.0
        %1030 = vmatprep.subr.mxu0 0.0
        %1031 = vmatpush1.msra.mxu0 0.0
        %1032 = vmatprep.subr.mxu0 0.0
        %1033 = vmatpush1.msra.mxu0 0.0
        %1034 = vmatprep.subr.mxu0 0.0
        %1035 = vmatpush1.msra.mxu0 0.0
        %1036 = vmatprep.subr.mxu0 0.0
        %1037 = vmatpush1.msra.mxu0 0.0
        %1038 = vmatprep.subr.mxu0 0.0
        %1039 = vmatpush1.msra.mxu0 0.0
        %1040 = vmatprep.subr.mxu0 0.0
        %1041 = vmatpush1.msra.mxu0 0.0
        %1042 = vmatprep.subr.mxu0 0.0
        %1043 = vmatpush1.msra.mxu0 0.0
        %1044 = vmatprep.subr.mxu0 0.0
        %1045 = vmatpush1.msra.mxu0 0.0
        %1046 = vmatprep.subr.mxu0 0.0
        %1047 = vmatpush1.msra.mxu0 0.0
        %1048 = vmatprep.subr.mxu0 0.0
        %1049 = vmatpush1.msra.mxu0 0.0
        %1050 = vmatprep.subr.mxu0 0.0
        %1051 = vmatpush1.msra.mxu0 0.0
        %1052 = vmatprep.subr.mxu0 0.0
        %1053 = vmatpush1.msra.mxu0 0.0
        %1054 = vmatprep.subr.mxu0 0.0
        %1055 = vmatpush1.msra.mxu0 0.0
        %1056 = vmatprep.subr.mxu0 0.0
        %1057 = vmatpush1.msra.mxu0 0.0
        %1058 = vmatprep.subr.mxu0 0.0
        %1059 = vmatpush1.msra.mxu0 0.0
        %1060 = vmatprep.subr.mxu0 0.0
        %1061 = vmatpush1.msra.mxu0 0.0
        %1062 = vmatprep.subr.mxu0 0.0
        %1063 = vmatpush1.msra.mxu0 0.0
        %1064 = vmatprep.subr.mxu0 0.0
        %1065 = vmatpush1.msra.mxu0 0.0
        %1066 = vmatprep.subr.mxu0 0.0
        %1067 = vmatpush1.msra.mxu0 0.0
        %1068 = vmatprep.subr.mxu0 0.0
        %1069 = vmatpush1.msra.mxu0 0.0
        %1070 = vmatprep.subr.mxu0 0.0
        %1071 = vmatpush1.msra.mxu0 0.0
        %1072 = vmatprep.subr.mxu0 0.0
        %1073 = vmatpush1.msra.mxu0 0.0
        %1074 = vmatprep.subr.mxu0 0.0
        %1075 = vmatpush1.msra.mxu0 0.0
        %1076 = vmatprep.subr.mxu0 0.0
        %1077 = vmatpush1.msra.mxu0 0.0
        %1078 = vmatprep.subr.mxu0 0.0
        %1079 = vmatpush1.msra.mxu0 0.0
        %1080 = vmatprep.subr.mxu0 0.0
        %1081 = vmatpush1.msra.mxu0 0.0
        %1082 = vmatprep.mubr.f32.mxu0 0.0
        %1083 = vmatmul.mubr.f32.gmra.mrb[0].mxu0 %v316
        %v1084 = vpop.f32.mrb[0].mxu0
        %v1085 = vadd.f32 0.0, %v1084
        %v1086 = vpop.f32.mrb[0].mxu0
        %1087 = vdwg.mxu0
        %1088 = vmatprep.subr.mxu0 0.0
        %1089 = vmatpush1.msra.mxu0 %v310
        %1090 = vmatprep.subr.mxu0 0.0
        %1091 = vmatpush1.msra.mxu0 %v311
        %1092 = vmatprep.subr.mxu0 0.0
        %1093 = vmatpush1.msra.mxu0 %v312
        %1094 = vmatprep.subr.mxu0 0.0
        %1095 = vmatpush1.msra.mxu0 %v313
        %1096 = vmatprep.subr.mxu0 0.0
        %1097 = vmatpush1.msra.mxu0 0.0
        %1098 = vmatprep.subr.mxu0 0.0
        %1099 = vmatpush1.msra.mxu0 0.0
        %1100 = vmatprep.subr.mxu0 0.0
        %1101 = vmatpush1.msra.mxu0 0.0
        %1102 = vmatprep.subr.mxu0 0.0
        %1103 = vmatpush1.msra.mxu0 0.0
        %1104 = vmatprep.subr.mxu0 0.0
        %1105 = vmatpush1.msra.mxu0 0.0
        %1106 = vmatprep.subr.mxu0 0.0
        %1107 = vmatpush1.msra.mxu0 0.0
        %1108 = vmatprep.subr.mxu0 0.0
        %1109 = vmatpush1.msra.mxu0 0.0
        %1110 = vmatprep.subr.mxu0 0.0
        %1111 = vmatpush1.msra.mxu0 0.0
        %1112 = vmatprep.subr.mxu0 0.0
        %1113 = vmatpush1.msra.mxu0 0.0
        %1114 = vmatprep.subr.mxu0 0.0
        %1115 = vmatpush1.msra.mxu0 0.0
        %1116 = vmatprep.subr.mxu0 0.0
        %1117 = vmatpush1.msra.mxu0 0.0
        %1118 = vmatprep.subr.mxu0 0.0
        %1119 = vmatpush1.msra.mxu0 0.0
        %1120 = vmatprep.subr.mxu0 0.0
        %1121 = vmatpush1.msra.mxu0 0.0
        %1122 = vmatprep.subr.mxu0 0.0
        %1123 = vmatpush1.msra.mxu0 0.0
        %1124 = vmatprep.subr.mxu0 0.0
        %1125 = vmatpush1.msra.mxu0 0.0
        %1126 = vmatprep.subr.mxu0 0.0
        %1127 = vmatpush1.msra.mxu0 0.0
        %1128 = vmatprep.subr.mxu0 0.0
        %1129 = vmatpush1.msra.mxu0 0.0
        %1130 = vmatprep.subr.mxu0 0.0
        %1131 = vmatpush1.msra.mxu0 0.0
        %1132 = vmatprep.subr.mxu0 0.0
        %1133 = vmatpush1.msra.mxu0 0.0
        %1134 = vmatprep.subr.mxu0 0.0
        %1135 = vmatpush1.msra.mxu0 0.0
        %1136 = vmatprep.subr.mxu0 0.0
        %1137 = vmatpush1.msra.mxu0 0.0
        %1138 = vmatprep.subr.mxu0 0.0
        %1139 = vmatpush1.msra.mxu0 0.0
        %1140 = vmatprep.subr.mxu0 0.0
        %1141 = vmatpush1.msra.mxu0 0.0
        %1142 = vmatprep.subr.mxu0 0.0
        %1143 = vmatpush1.msra.mxu0 0.0
        %1144 = vmatprep.subr.mxu0 0.0
        %1145 = vmatpush1.msra.mxu0 0.0
        %1146 = vmatprep.subr.mxu0 0.0
        %1147 = vmatpush1.msra.mxu0 0.0
        %1148 = vmatprep.subr.mxu0 0.0
        %1149 = vmatpush1.msra.mxu0 0.0
        %1150 = vmatprep.subr.mxu0 0.0
        %1151 = vmatpush1.msra.mxu0 0.0
        %1152 = vmatprep.mubr.f32.mxu0 0.0
        %1153 = vmatmul.mubr.f32.gmra.mrb[0].mxu0 %v316
        %v1154 = vpop.f32.mrb[0].mxu0
        %v1155 = vadd.f32 0.0, %v1154
        %v1156 = vpop.f32.mrb[0].mxu0
        %1157 = vdwg.mxu0
        %vm1158 = vcmask 130048
        %1159 = vst.msk [vmem:[%s253] sm:$0xff] %vm1158, %v385
        %1160 = vst.msk [vmem:[%s253 + $0x8] sm:$0xff] %vm1158, %v455
        %1161 = vst.msk [vmem:[%s253 + $0x10] sm:$0xff] %vm1158, %v525
        %1162 = vst.msk [vmem:[%s253 + $0x18] sm:$0xff] %vm1158, %v595
        %1163 = vst.msk [vmem:[%s260] sm:$0xff] %vm1158, %v665
        %1164 = vst.msk [vmem:[%s260 + $0x8] sm:$0xff] %vm1158, %v735
        %1165 = vst.msk [vmem:[%s260 + $0x10] sm:$0xff] %vm1158, %v805
        %1166 = vst.msk [vmem:[%s260 + $0x18] sm:$0xff] %vm1158, %v875
        %v1168 = vsel %vm1158, %v945, 0
        %v1171 = vsel %vm1158, %v385, 0
        %1173 = vmatprep.subr.mxu0 0.0
        %1174 = vmatpush1.xpose.msra.mxu0 %v1171
        %1175 = vmatprep.subr.mxu0 0.0
        %1176 = vmatpush1.xpose.msra.mxu0 0.0
        %1177 = vmatprep.subr.mxu0 0.0
        %1178 = vmatpush1.xpose.msra.mxu0 0.0
        %1179 = vmatprep.subr.mxu0 0.0
        %1180 = vmatpush1.xpose.msra.mxu0 0.0
        %1181 = vmatprep.subr.mxu0 0.0
        %1182 = vmatpush1.xpose.msra.mxu0 0.0
        %1183 = vmatprep.subr.mxu0 0.0
        %1184 = vmatpush1.xpose.msra.mxu0 0.0
        %1185 = vmatprep.subr.mxu0 0.0
        %1186 = vmatpush1.xpose.msra.mxu0 0.0
        %1187 = vmatprep.subr.mxu0 0.0
        %1188 = vmatpush1.xpose.msra.mxu0 0.0
        %1189 = vmatprep.subr.mxu0 0.0
        %1190 = vmatpush1.xpose.msra.mxu0 0.0
        %1191 = vmatprep.subr.mxu0 0.0
        %1192 = vmatpush1.xpose.msra.mxu0 0.0
        %1193 = vmatprep.subr.mxu0 0.0
        %1194 = vmatpush1.xpose.msra.mxu0 0.0
        %1195 = vmatprep.subr.mxu0 0.0
        %1196 = vmatpush1.xpose.msra.mxu0 0.0
        %1197 = vmatprep.subr.mxu0 0.0
        %1198 = vmatpush1.xpose.msra.mxu0 0.0
        %1199 = vmatprep.subr.mxu0 0.0
        %1200 = vmatpush1.xpose.msra.mxu0 0.0
        %1201 = vmatprep.subr.mxu0 0.0
        %1202 = vmatpush1.xpose.msra.mxu0 0.0
        %1203 = vmatprep.subr.mxu0 0.0
        %1204 = vmatpush1.xpose.msra.mxu0 0.0
        %1205 = vmatprep.subr.mxu0 0.0
        %1206 = vmatpush1.xpose.msra.mxu0 0.0
        %1207 = vmatprep.subr.mxu0 0.0
        %1208 = vmatpush1.xpose.msra.mxu0 0.0
        %1209 = vmatprep.subr.mxu0 0.0
        %1210 = vmatpush1.xpose.msra.mxu0 0.0
        %1211 = vmatprep.subr.mxu0 0.0
        %1212 = vmatpush1.xpose.msra.mxu0 0.0
        %1213 = vmatprep.subr.mxu0 0.0
        %1214 = vmatpush1.xpose.msra.mxu0 0.0
        %1215 = vmatprep.subr.mxu0 0.0
        %1216 = vmatpush1.xpose.msra.mxu0 0.0
        %1217 = vmatprep.subr.mxu0 0.0
        %1218 = vmatpush1.xpose.msra.mxu0 0.0
        %1219 = vmatprep.subr.mxu0 0.0
        %1220 = vmatpush1.xpose.msra.mxu0 0.0
        %1221 = vmatprep.subr.mxu0 0.0
        %1222 = vmatpush1.xpose.msra.mxu0 0.0
        %1223 = vmatprep.subr.mxu0 0.0
        %1224 = vmatpush1.xpose.msra.mxu0 0.0
        %1225 = vmatprep.subr.mxu0 0.0
        %1226 = vmatpush1.xpose.msra.mxu0 0.0
        %1227 = vmatprep.subr.mxu0 0.0
        %1228 = vmatpush1.xpose.msra.mxu0 0.0
        %1229 = vmatprep.subr.mxu0 0.0
        %1230 = vmatpush1.xpose.msra.mxu0 0.0
        %1231 = vmatprep.subr.mxu0 0.0
        %1232 = vmatpush1.xpose.msra.mxu0 0.0
        %1233 = vmatprep.subr.mxu0 0.0
        %1234 = vmatpush1.xpose.msra.mxu0 0.0
        %1235 = vmatprep.subr.mxu0 0.0
        %1236 = vmatpush1.xpose.msra.mxu0 0.0
        %1237 = vmatprep.mubr.f32.mxu0 0.0
        %1238 = vmatmul.mubr.f32.gmra.mrb[0].mxu0 %v1168
        %v1239 = vpop.f32.mrb[0].mxu0
        %v1240 = vadd.f32 0.0, %v1239
        %v1241 = vpop.f32.mrb[0].mxu0
        %1242 = vdwg.mxu0
        %v1244 = vsel %vm1158, %v1015, 0
        %v1247 = vsel %vm1158, %v455, 0
        %1249 = vmatprep.subr.mxu0 0.0
        %1250 = vmatpush1.xpose.msra.mxu0 %v1247
        %1251 = vmatprep.subr.mxu0 0.0
        %1252 = vmatpush1.xpose.msra.mxu0 0.0
        %1253 = vmatprep.subr.mxu0 0.0
        %1254 = vmatpush1.xpose.msra.mxu0 0.0
        %1255 = vmatprep.subr.mxu0 0.0
        %1256 = vmatpush1.xpose.msra.mxu0 0.0
        %1257 = vmatprep.subr.mxu0 0.0
        %1258 = vmatpush1.xpose.msra.mxu0 0.0
        %1259 = vmatprep.subr.mxu0 0.0
        %1260 = vmatpush1.xpose.msra.mxu0 0.0
        %1261 = vmatprep.subr.mxu0 0.0
        %1262 = vmatpush1.xpose.msra.mxu0 0.0
        %1263 = vmatprep.subr.mxu0 0.0
        %1264 = vmatpush1.xpose.msra.mxu0 0.0
        %1265 = vmatprep.subr.mxu0 0.0
        %1266 = vmatpush1.xpose.msra.mxu0 0.0
        %1267 = vmatprep.subr.mxu0 0.0
        %1268 = vmatpush1.xpose.msra.mxu0 0.0
        %1269 = vmatprep.subr.mxu0 0.0
        %1270 = vmatpush1.xpose.msra.mxu0 0.0
        %1271 = vmatprep.subr.mxu0 0.0
        %1272 = vmatpush1.xpose.msra.mxu0 0.0
        %1273 = vmatprep.subr.mxu0 0.0
        %1274 = vmatpush1.xpose.msra.mxu0 0.0
        %1275 = vmatprep.subr.mxu0 0.0
        %1276 = vmatpush1.xpose.msra.mxu0 0.0
        %1277 = vmatprep.subr.mxu0 0.0
        %1278 = vmatpush1.xpose.msra.mxu0 0.0
        %1279 = vmatprep.subr.mxu0 0.0
        %1280 = vmatpush1.xpose.msra.mxu0 0.0
        %1281 = vmatprep.subr.mxu0 0.0
        %1282 = vmatpush1.xpose.msra.mxu0 0.0
        %1283 = vmatprep.subr.mxu0 0.0
        %1284 = vmatpush1.xpose.msra.mxu0 0.0
        %1285 = vmatprep.subr.mxu0 0.0
        %1286 = vmatpush1.xpose.msra.mxu0 0.0
        %1287 = vmatprep.subr.mxu0 0.0
        %1288 = vmatpush1.xpose.msra.mxu0 0.0
        %1289 = vmatprep.subr.mxu0 0.0
        %1290 = vmatpush1.xpose.msra.mxu0 0.0
        %1291 = vmatprep.subr.mxu0 0.0
        %1292 = vmatpush1.xpose.msra.mxu0 0.0
        %1293 = vmatprep.subr.mxu0 0.0
        %1294 = vmatpush1.xpose.msra.mxu0 0.0
        %1295 = vmatprep.subr.mxu0 0.0
        %1296 = vmatpush1.xpose.msra.mxu0 0.0
        %1297 = vmatprep.subr.mxu0 0.0
        %1298 = vmatpush1.xpose.msra.mxu0 0.0
        %1299 = vmatprep.subr.mxu0 0.0
        %1300 = vmatpush1.xpose.msra.mxu0 0.0
        %1301 = vmatprep.subr.mxu0 0.0
        %1302 = vmatpush1.xpose.msra.mxu0 0.0
        %1303 = vmatprep.subr.mxu0 0.0
        %1304 = vmatpush1.xpose.msra.mxu0 0.0
        %1305 = vmatprep.subr.mxu0 0.0
        %1306 = vmatpush1.xpose.msra.mxu0 0.0
        %1307 = vmatprep.subr.mxu0 0.0
        %1308 = vmatpush1.xpose.msra.mxu0 0.0
        %1309 = vmatprep.subr.mxu0 0.0
        %1310 = vmatpush1.xpose.msra.mxu0 0.0
        %1311 = vmatprep.subr.mxu0 0.0
        %1312 = vmatpush1.xpose.msra.mxu0 0.0
        %1313 = vmatprep.mubr.f32.mxu0 0.0
        %1314 = vmatmul.mubr.f32.gmra.mrb[0].mxu0 %v1244
        %v1315 = vpop.f32.mrb[0].mxu0
        %v1316 = vadd.f32 0.0, %v1315
        %v1317 = vpop.f32.mrb[0].mxu0
        %1318 = vdwg.mxu0
        %v1320 = vsel %vm1158, %v1085, 0
        %v1323 = vsel %vm1158, %v525, 0
        %1325 = vmatprep.subr.mxu0 0.0
        %1326 = vmatpush1.xpose.msra.mxu0 %v1323
        %1327 = vmatprep.subr.mxu0 0.0
        %1328 = vmatpush1.xpose.msra.mxu0 0.0
        %1329 = vmatprep.subr.mxu0 0.0
        %1330 = vmatpush1.xpose.msra.mxu0 0.0
        %1331 = vmatprep.subr.mxu0 0.0
        %1332 = vmatpush1.xpose.msra.mxu0 0.0
        %1333 = vmatprep.subr.mxu0 0.0
        %1334 = vmatpush1.xpose.msra.mxu0 0.0
        %1335 = vmatprep.subr.mxu0 0.0
        %1336 = vmatpush1.xpose.msra.mxu0 0.0
        %1337 = vmatprep.subr.mxu0 0.0
        %1338 = vmatpush1.xpose.msra.mxu0 0.0
        %1339 = vmatprep.subr.mxu0 0.0
        %1340 = vmatpush1.xpose.msra.mxu0 0.0
        %1341 = vmatprep.subr.mxu0 0.0
        %1342 = vmatpush1.xpose.msra.mxu0 0.0
        %1343 = vmatprep.subr.mxu0 0.0
        %1344 = vmatpush1.xpose.msra.mxu0 0.0
        %1345 = vmatprep.subr.mxu0 0.0
        %1346 = vmatpush1.xpose.msra.mxu0 0.0
        %1347 = vmatprep.subr.mxu0 0.0
        %1348 = vmatpush1.xpose.msra.mxu0 0.0
        %1349 = vmatprep.subr.mxu0 0.0
        %1350 = vmatpush1.xpose.msra.mxu0 0.0
        %1351 = vmatprep.subr.mxu0 0.0
        %1352 = vmatpush1.xpose.msra.mxu0 0.0
        %1353 = vmatprep.subr.mxu0 0.0
        %1354 = vmatpush1.xpose.msra.mxu0 0.0
        %1355 = vmatprep.subr.mxu0 0.0
        %1356 = vmatpush1.xpose.msra.mxu0 0.0
        %1357 = vmatprep.subr.mxu0 0.0
        %1358 = vmatpush1.xpose.msra.mxu0 0.0
        %1359 = vmatprep.subr.mxu0 0.0
        %1360 = vmatpush1.xpose.msra.mxu0 0.0
        %1361 = vmatprep.subr.mxu0 0.0
        %1362 = vmatpush1.xpose.msra.mxu0 0.0
        %1363 = vmatprep.subr.mxu0 0.0
        %1364 = vmatpush1.xpose.msra.mxu0 0.0
        %1365 = vmatprep.subr.mxu0 0.0
        %1366 = vmatpush1.xpose.msra.mxu0 0.0
        %1367 = vmatprep.subr.mxu0 0.0
        %1368 = vmatpush1.xpose.msra.mxu0 0.0
        %1369 = vmatprep.subr.mxu0 0.0
        %1370 = vmatpush1.xpose.msra.mxu0 0.0
        %1371 = vmatprep.subr.mxu0 0.0
        %1372 = vmatpush1.xpose.msra.mxu0 0.0
        %1373 = vmatprep.subr.mxu0 0.0
        %1374 = vmatpush1.xpose.msra.mxu0 0.0
        %1375 = vmatprep.subr.mxu0 0.0
        %1376 = vmatpush1.xpose.msra.mxu0 0.0
        %1377 = vmatprep.subr.mxu0 0.0
        %1378 = vmatpush1.xpose.msra.mxu0 0.0
        %1379 = vmatprep.subr.mxu0 0.0
        %1380 = vmatpush1.xpose.msra.mxu0 0.0
        %1381 = vmatprep.subr.mxu0 0.0
        %1382 = vmatpush1.xpose.msra.mxu0 0.0
        %1383 = vmatprep.subr.mxu0 0.0
        %1384 = vmatpush1.xpose.msra.mxu0 0.0
        %1385 = vmatprep.subr.mxu0 0.0
        %1386 = vmatpush1.xpose.msra.mxu0 0.0
        %1387 = vmatprep.subr.mxu0 0.0
        %1388 = vmatpush1.xpose.msra.mxu0 0.0
        %1389 = vmatprep.mubr.f32.mxu0 0.0
        %1390 = vmatmul.mubr.f32.gmra.mrb[0].mxu0 %v1320
        %v1391 = vpop.f32.mrb[0].mxu0
        %v1392 = vadd.f32 0.0, %v1391
        %v1393 = vpop.f32.mrb[0].mxu0
        %1394 = vdwg.mxu0
        %v1396 = vsel %vm1158, %v1155, 0
        %v1399 = vsel %vm1158, %v595, 0
        %1401 = vmatprep.subr.mxu0 0.0
        %1402 = vmatpush1.xpose.msra.mxu0 %v1399
        %1403 = vmatprep.subr.mxu0 0.0
        %1404 = vmatpush1.xpose.msra.mxu0 0.0
        %1405 = vmatprep.subr.mxu0 0.0
        %1406 = vmatpush1.xpose.msra.mxu0 0.0
        %1407 = vmatprep.subr.mxu0 0.0
        %1408 = vmatpush1.xpose.msra.mxu0 0.0
        %1409 = vmatprep.subr.mxu0 0.0
        %1410 = vmatpush1.xpose.msra.mxu0 0.0
        %1411 = vmatprep.subr.mxu0 0.0
        %1412 = vmatpush1.xpose.msra.mxu0 0.0
        %1413 = vmatprep.subr.mxu0 0.0
        %1414 = vmatpush1.xpose.msra.mxu0 0.0
        %1415 = vmatprep.subr.mxu0 0.0
        %1416 = vmatpush1.xpose.msra.mxu0 0.0
        %1417 = vmatprep.subr.mxu0 0.0
        %1418 = vmatpush1.xpose.msra.mxu0 0.0
        %1419 = vmatprep.subr.mxu0 0.0
        %1420 = vmatpush1.xpose.msra.mxu0 0.0
        %1421 = vmatprep.subr.mxu0 0.0
        %1422 = vmatpush1.xpose.msra.mxu0 0.0
        %1423 = vmatprep.subr.mxu0 0.0
        %1424 = vmatpush1.xpose.msra.mxu0 0.0
        %1425 = vmatprep.subr.mxu0 0.0
        %1426 = vmatpush1.xpose.msra.mxu0 0.0
        %1427 = vmatprep.subr.mxu0 0.0
        %1428 = vmatpush1.xpose.msra.mxu0 0.0
        %1429 = vmatprep.subr.mxu0 0.0
        %1430 = vmatpush1.xpose.msra.mxu0 0.0
        %1431 = vmatprep.subr.mxu0 0.0
        %1432 = vmatpush1.xpose.msra.mxu0 0.0
        %1433 = vmatprep.subr.mxu0 0.0
        %1434 = vmatpush1.xpose.msra.mxu0 0.0
        %1435 = vmatprep.subr.mxu0 0.0
        %1436 = vmatpush1.xpose.msra.mxu0 0.0
        %1437 = vmatprep.subr.mxu0 0.0
        %1438 = vmatpush1.xpose.msra.mxu0 0.0
        %1439 = vmatprep.subr.mxu0 0.0
        %1440 = vmatpush1.xpose.msra.mxu0 0.0
        %1441 = vmatprep.subr.mxu0 0.0
        %1442 = vmatpush1.xpose.msra.mxu0 0.0
        %1443 = vmatprep.subr.mxu0 0.0
        %1444 = vmatpush1.xpose.msra.mxu0 0.0
        %1445 = vmatprep.subr.mxu0 0.0
        %1446 = vmatpush1.xpose.msra.mxu0 0.0
        %1447 = vmatprep.subr.mxu0 0.0
        %1448 = vmatpush1.xpose.msra.mxu0 0.0
        %1449 = vmatprep.subr.mxu0 0.0
        %1450 = vmatpush1.xpose.msra.mxu0 0.0
        %1451 = vmatprep.subr.mxu0 0.0
        %1452 = vmatpush1.xpose.msra.mxu0 0.0
        %1453 = vmatprep.subr.mxu0 0.0
        %1454 = vmatpush1.xpose.msra.mxu0 0.0
        %1455 = vmatprep.subr.mxu0 0.0
        %1456 = vmatpush1.xpose.msra.mxu0 0.0
        %1457 = vmatprep.subr.mxu0 0.0
        %1458 = vmatpush1.xpose.msra.mxu0 0.0
        %1459 = vmatprep.subr.mxu0 0.0
        %1460 = vmatpush1.xpose.msra.mxu0 0.0
        %1461 = vmatprep.subr.mxu0 0.0
        %1462 = vmatpush1.xpose.msra.mxu0 0.0
        %1463 = vmatprep.subr.mxu0 0.0
        %1464 = vmatpush1.xpose.msra.mxu0 0.0
        %1465 = vmatprep.mubr.f32.mxu0 0.0
        %1466 = vmatmul.mubr.f32.gmra.mrb[0].mxu0 %v1396
        %v1467 = vpop.f32.mrb[0].mxu0
        %v1468 = vadd.f32 0.0, %v1467
        %v1469 = vpop.f32.mrb[0].mxu0
        %1470 = vdwg.mxu0
        %vm1471 = vcmask 64512
        %v1472 = vsel %vm1471, %v1240, -inf
        %1473 = vmax.xlane.f32.xlu0 %v1472
        %v1474 = vpop.xlane.xlu0 %1473
        %v1475 = vsel %vm1471, %v1316, -inf
        %1476 = vmax.xlane.f32.xlu0 %v1475
        %v1477 = vpop.xlane.xlu0 %1476
        %v1478 = vsel %vm1471, %v1392, -inf
        %1479 = vmax.xlane.f32.xlu0 %v1478
        %v1480 = vpop.xlane.xlu0 %1479
        %v1481 = vsel %vm1471, %v1468, -inf
        %1482 = vmax.xlane.f32.xlu0 %v1481
        %v1483 = vpop.xlane.xlu0 %1482
        %v1484 = vsub.f32 %v1240, %v1474
        %v1485 = vsub.f32 %v1316, %v1477
        %v1486 = vsub.f32 %v1392, %v1480
        %v1487 = vsub.f32 %v1468, %v1483
        %v1488 = vmul.f32 %v1484, 1.442695
        %v1489 = vpow.pop %v1488
        %v1490 = vmul.f32 %v1485, 1.442695
        %v1491 = vpow.pop %v1490
        %v1492 = vmul.f32 %v1486, 1.442695
        %v1493 = vpow.pop %v1492
        %v1494 = vmul.f32 %v1487, 1.442695
        %v1495 = vpow.pop %v1494
        %v1496 = vsel %vm1471, %v1489, 0.0
        %1497 = vadd.xlane.f32.xlu0 %v1496
        %v1498 = vpop.xlane.xlu0 %1497
        %v1499 = vsel %vm1471, %v1491, 0.0
        %1500 = vadd.xlane.f32.xlu0 %v1499
        %v1501 = vpop.xlane.xlu0 %1500
        %v1502 = vsel %vm1471, %v1493, 0.0
        %1503 = vadd.xlane.f32.xlu0 %v1502
        %v1504 = vpop.xlane.xlu0 %1503
        %v1505 = vsel %vm1471, %v1495, 0.0
        %1506 = vadd.xlane.f32.xlu0 %v1505
        %v1507 = vpop.xlane.xlu0 %1506
        %v1508 = vrcp.pop %v1498
        %v1509 = vmul.f32 %v1489, %v1508
        %v1510 = vrcp.pop %v1501
        %v1511 = vmul.f32 %v1491, %v1510
        %v1512 = vrcp.pop %v1504
        %v1513 = vmul.f32 %v1493, %v1512
        %v1514 = vrcp.pop %v1507
        %v1515 = vmul.f32 %v1495, %v1514
        %v1517 = vsel %vm1471, %v1509, 0
        %1519 = vmatprep.subr.mxu0 0.0
        %1520 = vmatpush1.msra.mxu0 %v665
        %1521 = vmatprep.subr.mxu0 0.0
        %1522 = vmatpush1.msra.mxu0 0.0
        %1523 = vmatprep.subr.mxu0 0.0
        %1524 = vmatpush1.msra.mxu0 0.0
        %1525 = vmatprep.subr.mxu0 0.0
        %1526 = vmatpush1.msra.mxu0 0.0
        %1527 = vmatprep.subr.mxu0 0.0
        %1528 = vmatpush1.msra.mxu0 0.0
        %1529 = vmatprep.subr.mxu0 0.0
        %1530 = vmatpush1.msra.mxu0 0.0
        %1531 = vmatprep.subr.mxu0 0.0
        %1532 = vmatpush1.msra.mxu0 0.0
        %1533 = vmatprep.subr.mxu0 0.0
        %1534 = vmatpush1.msra.mxu0 0.0
        %1535 = vmatprep.subr.mxu0 0.0
        %1536 = vmatpush1.msra.mxu0 0.0
        %1537 = vmatprep.subr.mxu0 0.0
        %1538 = vmatpush1.msra.mxu0 0.0
        %1539 = vmatprep.subr.mxu0 0.0
        %1540 = vmatpush1.msra.mxu0 0.0
        %1541 = vmatprep.subr.mxu0 0.0
        %1542 = vmatpush1.msra.mxu0 0.0
        %1543 = vmatprep.subr.mxu0 0.0
        %1544 = vmatpush1.msra.mxu0 0.0
        %1545 = vmatprep.subr.mxu0 0.0
        %1546 = vmatpush1.msra.mxu0 0.0
        %1547 = vmatprep.subr.mxu0 0.0
        %1548 = vmatpush1.msra.mxu0 0.0
        %1549 = vmatprep.subr.mxu0 0.0
        %1550 = vmatpush1.msra.mxu0 0.0
        %1551 = vmatprep.subr.mxu0 0.0
        %1552 = vmatpush1.msra.mxu0 0.0
        %1553 = vmatprep.subr.mxu0 0.0
        %1554 = vmatpush1.msra.mxu0 0.0
        %1555 = vmatprep.subr.mxu0 0.0
        %1556 = vmatpush1.msra.mxu0 0.0
        %1557 = vmatprep.subr.mxu0 0.0
        %1558 = vmatpush1.msra.mxu0 0.0
        %1559 = vmatprep.subr.mxu0 0.0
        %1560 = vmatpush1.msra.mxu0 0.0
        %1561 = vmatprep.subr.mxu0 0.0
        %1562 = vmatpush1.msra.mxu0 0.0
        %1563 = vmatprep.subr.mxu0 0.0
        %1564 = vmatpush1.msra.mxu0 0.0
        %1565 = vmatprep.subr.mxu0 0.0
        %1566 = vmatpush1.msra.mxu0 0.0
        %1567 = vmatprep.subr.mxu0 0.0
        %1568 = vmatpush1.msra.mxu0 0.0
        %1569 = vmatprep.subr.mxu0 0.0
        %1570 = vmatpush1.msra.mxu0 0.0
        %1571 = vmatprep.subr.mxu0 0.0
        %1572 = vmatpush1.msra.mxu0 0.0
        %1573 = vmatprep.subr.mxu0 0.0
        %1574 = vmatpush1.msra.mxu0 0.0
        %1575 = vmatprep.subr.mxu0 0.0
        %1576 = vmatpush1.msra.mxu0 0.0
        %1577 = vmatprep.subr.mxu0 0.0
        %1578 = vmatpush1.msra.mxu0 0.0
        %1579 = vmatprep.subr.mxu0 0.0
        %1580 = vmatpush1.msra.mxu0 0.0
        %1581 = vmatprep.subr.mxu0 0.0
        %1582 = vmatpush1.msra.mxu0 0.0
        %1583 = vmatprep.mubr.f32.mxu0 0.0
        %1584 = vmatmul.mubr.f32.gmra.mrb[0].mxu0 %v1517
        %v1585 = vpop.f32.mrb[0].mxu0
        %v1586 = vadd.f32 0.0, %v1585
        %v1587 = vpop.f32.mrb[0].mxu0
        %1588 = vdwg.mxu0
        %v1590 = vsel %vm1471, %v1511, 0
        %1592 = vmatprep.subr.mxu0 0.0
        %1593 = vmatpush1.msra.mxu0 %v735
        %1594 = vmatprep.subr.mxu0 0.0
        %1595 = vmatpush1.msra.mxu0 0.0
        %1596 = vmatprep.subr.mxu0 0.0
        %1597 = vmatpush1.msra.mxu0 0.0
        %1598 = vmatprep.subr.mxu0 0.0
        %1599 = vmatpush1.msra.mxu0 0.0
        %1600 = vmatprep.subr.mxu0 0.0
        %1601 = vmatpush1.msra.mxu0 0.0
        %1602 = vmatprep.subr.mxu0 0.0
        %1603 = vmatpush1.msra.mxu0 0.0
        %1604 = vmatprep.subr.mxu0 0.0
        %1605 = vmatpush1.msra.mxu0 0.0
        %1606 = vmatprep.subr.mxu0 0.0
        %1607 = vmatpush1.msra.mxu0 0.0
        %1608 = vmatprep.subr.mxu0 0.0
        %1609 = vmatpush1.msra.mxu0 0.0
        %1610 = vmatprep.subr.mxu0 0.0
        %1611 = vmatpush1.msra.mxu0 0.0
        %1612 = vmatprep.subr.mxu0 0.0
        %1613 = vmatpush1.msra.mxu0 0.0
        %1614 = vmatprep.subr.mxu0 0.0
        %1615 = vmatpush1.msra.mxu0 0.0
        %1616 = vmatprep.subr.mxu0 0.0
        %1617 = vmatpush1.msra.mxu0 0.0
        %1618 = vmatprep.subr.mxu0 0.0
        %1619 = vmatpush1.msra.mxu0 0.0
        %1620 = vmatprep.subr.mxu0 0.0
        %1621 = vmatpush1.msra.mxu0 0.0
        %1622 = vmatprep.subr.mxu0 0.0
        %1623 = vmatpush1.msra.mxu0 0.0
        %1624 = vmatprep.subr.mxu0 0.0
        %1625 = vmatpush1.msra.mxu0 0.0
        %1626 = vmatprep.subr.mxu0 0.0
        %1627 = vmatpush1.msra.mxu0 0.0
        %1628 = vmatprep.subr.mxu0 0.0
        %1629 = vmatpush1.msra.mxu0 0.0
        %1630 = vmatprep.subr.mxu0 0.0
        %1631 = vmatpush1.msra.mxu0 0.0
        %1632 = vmatprep.subr.mxu0 0.0
        %1633 = vmatpush1.msra.mxu0 0.0
        %1634 = vmatprep.subr.mxu0 0.0
        %1635 = vmatpush1.msra.mxu0 0.0
        %1636 = vmatprep.subr.mxu0 0.0
        %1637 = vmatpush1.msra.mxu0 0.0
        %1638 = vmatprep.subr.mxu0 0.0
        %1639 = vmatpush1.msra.mxu0 0.0
        %1640 = vmatprep.subr.mxu0 0.0
        %1641 = vmatpush1.msra.mxu0 0.0
        %1642 = vmatprep.subr.mxu0 0.0
        %1643 = vmatpush1.msra.mxu0 0.0
        %1644 = vmatprep.subr.mxu0 0.0
        %1645 = vmatpush1.msra.mxu0 0.0
        %1646 = vmatprep.subr.mxu0 0.0
        %1647 = vmatpush1.msra.mxu0 0.0
        %1648 = vmatprep.subr.mxu0 0.0
        %1649 = vmatpush1.msra.mxu0 0.0
        %1650 = vmatprep.subr.mxu0 0.0
        %1651 = vmatpush1.msra.mxu0 0.0
        %1652 = vmatprep.subr.mxu0 0.0
        %1653 = vmatpush1.msra.mxu0 0.0
        %1654 = vmatprep.subr.mxu0 0.0
        %1655 = vmatpush1.msra.mxu0 0.0
        %1656 = vmatprep.mubr.f32.mxu0 0.0
        %1657 = vmatmul.mubr.f32.gmra.mrb[0].mxu0 %v1590
        %v1658 = vpop.f32.mrb[0].mxu0
        %v1659 = vadd.f32 0.0, %v1658
        %v1660 = vpop.f32.mrb[0].mxu0
        %1661 = vdwg.mxu0
        %v1663 = vsel %vm1471, %v1513, 0
        %1665 = vmatprep.subr.mxu0 0.0
        %1666 = vmatpush1.msra.mxu0 %v805
        %1667 = vmatprep.subr.mxu0 0.0
        %1668 = vmatpush1.msra.mxu0 0.0
        %1669 = vmatprep.subr.mxu0 0.0
        %1670 = vmatpush1.msra.mxu0 0.0
        %1671 = vmatprep.subr.mxu0 0.0
        %1672 = vmatpush1.msra.mxu0 0.0
        %1673 = vmatprep.subr.mxu0 0.0
        %1674 = vmatpush1.msra.mxu0 0.0
        %1675 = vmatprep.subr.mxu0 0.0
        %1676 = vmatpush1.msra.mxu0 0.0
        %1677 = vmatprep.subr.mxu0 0.0
        %1678 = vmatpush1.msra.mxu0 0.0
        %1679 = vmatprep.subr.mxu0 0.0
        %1680 = vmatpush1.msra.mxu0 0.0
        %1681 = vmatprep.subr.mxu0 0.0
        %1682 = vmatpush1.msra.mxu0 0.0
        %1683 = vmatprep.subr.mxu0 0.0
        %1684 = vmatpush1.msra.mxu0 0.0
        %1685 = vmatprep.subr.mxu0 0.0
        %1686 = vmatpush1.msra.mxu0 0.0
        %1687 = vmatprep.subr.mxu0 0.0
        %1688 = vmatpush1.msra.mxu0 0.0
        %1689 = vmatprep.subr.mxu0 0.0
        %1690 = vmatpush1.msra.mxu0 0.0
        %1691 = vmatprep.subr.mxu0 0.0
        %1692 = vmatpush1.msra.mxu0 0.0
        %1693 = vmatprep.subr.mxu0 0.0
        %1694 = vmatpush1.msra.mxu0 0.0
        %1695 = vmatprep.subr.mxu0 0.0
        %1696 = vmatpush1.msra.mxu0 0.0
        %1697 = vmatprep.subr.mxu0 0.0
        %1698 = vmatpush1.msra.mxu0 0.0
        %1699 = vmatprep.subr.mxu0 0.0
        %1700 = vmatpush1.msra.mxu0 0.0
        %1701 = vmatprep.subr.mxu0 0.0
        %1702 = vmatpush1.msra.mxu0 0.0
        %1703 = vmatprep.subr.mxu0 0.0
        %1704 = vmatpush1.msra.mxu0 0.0
        %1705 = vmatprep.subr.mxu0 0.0
        %1706 = vmatpush1.msra.mxu0 0.0
        %1707 = vmatprep.subr.mxu0 0.0
        %1708 = vmatpush1.msra.mxu0 0.0
        %1709 = vmatprep.subr.mxu0 0.0
        %1710 = vmatpush1.msra.mxu0 0.0
        %1711 = vmatprep.subr.mxu0 0.0
        %1712 = vmatpush1.msra.mxu0 0.0
        %1713 = vmatprep.subr.mxu0 0.0
        %1714 = vmatpush1.msra.mxu0 0.0
        %1715 = vmatprep.subr.mxu0 0.0
        %1716 = vmatpush1.msra.mxu0 0.0
        %1717 = vmatprep.subr.mxu0 0.0
        %1718 = vmatpush1.msra.mxu0 0.0
        %1719 = vmatprep.subr.mxu0 0.0
        %1720 = vmatpush1.msra.mxu0 0.0
        %1721 = vmatprep.subr.mxu0 0.0
        %1722 = vmatpush1.msra.mxu0 0.0
        %1723 = vmatprep.subr.mxu0 0.0
        %1724 = vmatpush1.msra.mxu0 0.0
        %1725 = vmatprep.subr.mxu0 0.0
        %1726 = vmatpush1.msra.mxu0 0.0
        %1727 = vmatprep.subr.mxu0 0.0
        %1728 = vmatpush1.msra.mxu0 0.0
        %1729 = vmatprep.mubr.f32.mxu0 0.0
        %1730 = vmatmul.mubr.f32.gmra.mrb[0].mxu0 %v1663
        %v1731 = vpop.f32.mrb[0].mxu0
        %v1732 = vadd.f32 0.0, %v1731
        %v1733 = vpop.f32.mrb[0].mxu0
        %1734 = vdwg.mxu0
        %v1736 = vsel %vm1471, %v1515, 0
        %1738 = vmatprep.subr.mxu0 0.0
        %1739 = vmatpush1.msra.mxu0 %v875
        %1740 = vmatprep.subr.mxu0 0.0
        %1741 = vmatpush1.msra.mxu0 0.0
        %1742 = vmatprep.subr.mxu0 0.0
        %1743 = vmatpush1.msra.mxu0 0.0
        %1744 = vmatprep.subr.mxu0 0.0
        %1745 = vmatpush1.msra.mxu0 0.0
        %1746 = vmatprep.subr.mxu0 0.0
        %1747 = vmatpush1.msra.mxu0 0.0
        %1748 = vmatprep.subr.mxu0 0.0
        %1749 = vmatpush1.msra.mxu0 0.0
        %1750 = vmatprep.subr.mxu0 0.0
        %1751 = vmatpush1.msra.mxu0 0.0
        %1752 = vmatprep.subr.mxu0 0.0
        %1753 = vmatpush1.msra.mxu0 0.0
        %1754 = vmatprep.subr.mxu0 0.0
        %1755 = vmatpush1.msra.mxu0 0.0
        %1756 = vmatprep.subr.mxu0 0.0
        %1757 = vmatpush1.msra.mxu0 0.0
        %1758 = vmatprep.subr.mxu0 0.0
        %1759 = vmatpush1.msra.mxu0 0.0
        %1760 = vmatprep.subr.mxu0 0.0
        %1761 = vmatpush1.msra.mxu0 0.0
        %1762 = vmatprep.subr.mxu0 0.0
        %1763 = vmatpush1.msra.mxu0 0.0
        %1764 = vmatprep.subr.mxu0 0.0
        %1765 = vmatpush1.msra.mxu0 0.0
        %1766 = vmatprep.subr.mxu0 0.0
        %1767 = vmatpush1.msra.mxu0 0.0
        %1768 = vmatprep.subr.mxu0 0.0
        %1769 = vmatpush1.msra.mxu0 0.0
        %1770 = vmatprep.subr.mxu0 0.0
        %1771 = vmatpush1.msra.mxu0 0.0
        %1772 = vmatprep.subr.mxu0 0.0
        %1773 = vmatpush1.msra.mxu0 0.0
        %1774 = vmatprep.subr.mxu0 0.0
        %1775 = vmatpush1.msra.mxu0 0.0
        %1776 = vmatprep.subr.mxu0 0.0
        %1777 = vmatpush1.msra.mxu0 0.0
        %1778 = vmatprep.subr.mxu0 0.0
        %1779 = vmatpush1.msra.mxu0 0.0
        %1780 = vmatprep.subr.mxu0 0.0
        %1781 = vmatpush1.msra.mxu0 0.0
        %1782 = vmatprep.subr.mxu0 0.0
        %1783 = vmatpush1.msra.mxu0 0.0
        %1784 = vmatprep.subr.mxu0 0.0
        %1785 = vmatpush1.msra.mxu0 0.0
        %1786 = vmatprep.subr.mxu0 0.0
        %1787 = vmatpush1.msra.mxu0 0.0
        %1788 = vmatprep.subr.mxu0 0.0
        %1789 = vmatpush1.msra.mxu0 0.0
        %1790 = vmatprep.subr.mxu0 0.0
        %1791 = vmatpush1.msra.mxu0 0.0
        %1792 = vmatprep.subr.mxu0 0.0
        %1793 = vmatpush1.msra.mxu0 0.0
        %1794 = vmatprep.subr.mxu0 0.0
        %1795 = vmatpush1.msra.mxu0 0.0
        %1796 = vmatprep.subr.mxu0 0.0
        %1797 = vmatpush1.msra.mxu0 0.0
        %1798 = vmatprep.subr.mxu0 0.0
        %1799 = vmatpush1.msra.mxu0 0.0
        %1800 = vmatprep.subr.mxu0 0.0
        %1801 = vmatpush1.msra.mxu0 0.0
        %1802 = vmatprep.mubr.f32.mxu0 0.0
        %1803 = vmatmul.mubr.f32.gmra.mrb[0].mxu0 %v1736
        %v1804 = vpop.f32.mrb[0].mxu0
        %v1805 = vadd.f32 0.0, %v1804
        %v1806 = vpop.f32.mrb[0].mxu0
        %1807 = vdwg.mxu0
        %v1808 = vld [vmem:[%s2] sm:$0xff]
        %v1809 = vld [vmem:[%s2 + $0x8] sm:$0xff]
        %v1810 = vld [vmem:[%s2 + $0x10] sm:$0xff]
        %v1811 = vld [vmem:[%s2 + $0x18] sm:$0xff]
        %v1812 = vld [vmem:[%s2 + $0x20] sm:$0xff]
        %v1813 = vld [vmem:[%s2 + $0x28] sm:$0xff]
        %v1814 = vld [vmem:[%s2 + $0x30] sm:$0xff]
        %v1815 = vld [vmem:[%s2 + $0x38] sm:$0xff]
        %v1817 = vsel %vm1158, %v1586, 0
        %1819 = vmatprep.subr.mxu0 0.0
        %1820 = vmatpush1.msra.mxu0 %v1808
        %1821 = vmatprep.subr.mxu0 0.0
        %1822 = vmatpush1.msra.mxu0 %v1809
        %1823 = vmatprep.subr.mxu0 0.0
        %1824 = vmatpush1.msra.mxu0 0.0
        %1825 = vmatprep.subr.mxu0 0.0
        %1826 = vmatpush1.msra.mxu0 0.0
        %1827 = vmatprep.subr.mxu0 0.0
        %1828 = vmatpush1.msra.mxu0 0.0
        %1829 = vmatprep.subr.mxu0 0.0
        %1830 = vmatpush1.msra.mxu0 0.0
        %1831 = vmatprep.subr.mxu0 0.0
        %1832 = vmatpush1.msra.mxu0 0.0
        %1833 = vmatprep.subr.mxu0 0.0
        %1834 = vmatpush1.msra.mxu0 0.0
        %1835 = vmatprep.subr.mxu0 0.0
        %1836 = vmatpush1.msra.mxu0 0.0
        %1837 = vmatprep.subr.mxu0 0.0
        %1838 = vmatpush1.msra.mxu0 0.0
        %1839 = vmatprep.subr.mxu0 0.0
        %1840 = vmatpush1.msra.mxu0 0.0
        %1841 = vmatprep.subr.mxu0 0.0
        %1842 = vmatpush1.msra.mxu0 0.0
        %1843 = vmatprep.subr.mxu0 0.0
        %1844 = vmatpush1.msra.mxu0 0.0
        %1845 = vmatprep.subr.mxu0 0.0
        %1846 = vmatpush1.msra.mxu0 0.0
        %1847 = vmatprep.subr.mxu0 0.0
        %1848 = vmatpush1.msra.mxu0 0.0
        %1849 = vmatprep.subr.mxu0 0.0
        %1850 = vmatpush1.msra.mxu0 0.0
        %1851 = vmatprep.subr.mxu0 0.0
        %1852 = vmatpush1.msra.mxu0 0.0
        %1853 = vmatprep.subr.mxu0 0.0
        %1854 = vmatpush1.msra.mxu0 0.0
        %1855 = vmatprep.subr.mxu0 0.0
        %1856 = vmatpush1.msra.mxu0 0.0
        %1857 = vmatprep.subr.mxu0 0.0
        %1858 = vmatpush1.msra.mxu0 0.0
        %1859 = vmatprep.subr.mxu0 0.0
        %1860 = vmatpush1.msra.mxu0 0.0
        %1861 = vmatprep.subr.mxu0 0.0
        %1862 = vmatpush1.msra.mxu0 0.0
        %1863 = vmatprep.subr.mxu0 0.0
        %1864 = vmatpush1.msra.mxu0 0.0
        %1865 = vmatprep.subr.mxu0 0.0
        %1866 = vmatpush1.msra.mxu0 0.0
        %1867 = vmatprep.subr.mxu0 0.0
        %1868 = vmatpush1.msra.mxu0 0.0
        %1869 = vmatprep.subr.mxu0 0.0
        %1870 = vmatpush1.msra.mxu0 0.0
        %1871 = vmatprep.subr.mxu0 0.0
        %1872 = vmatpush1.msra.mxu0 0.0
        %1873 = vmatprep.subr.mxu0 0.0
        %1874 = vmatpush1.msra.mxu0 0.0
        %1875 = vmatprep.subr.mxu0 0.0
        %1876 = vmatpush1.msra.mxu0 0.0
        %1877 = vmatprep.subr.mxu0 0.0
        %1878 = vmatpush1.msra.mxu0 0.0
        %1879 = vmatprep.subr.mxu0 0.0
        %1880 = vmatpush1.msra.mxu0 0.0
        %1881 = vmatprep.subr.mxu0 0.0
        %1882 = vmatpush1.msra.mxu0 0.0
        %1883 = vmatprep.mubr.f32.mxu0 0.0
        %1884 = vmatmul.mubr.f32.gmra.mrb[0].mxu0 %v1817
        %v1885 = vpop.f32.mrb[0].mxu0
        %v1886 = vadd.f32 0.0, %v1885
        %v1887 = vpop.f32.mrb[0].mxu0
        %1888 = vdwg.mxu0
        %v1890 = vsel %vm1158, %v1659, 0
        %1892 = vmatprep.subr.mxu0 0.0
        %1893 = vmatpush1.msra.mxu0 %v1810
        %1894 = vmatprep.subr.mxu0 0.0
        %1895 = vmatpush1.msra.mxu0 %v1811
        %1896 = vmatprep.subr.mxu0 0.0
        %1897 = vmatpush1.msra.mxu0 0.0
        %1898 = vmatprep.subr.mxu0 0.0
        %1899 = vmatpush1.msra.mxu0 0.0
        %1900 = vmatprep.subr.mxu0 0.0
        %1901 = vmatpush1.msra.mxu0 0.0
        %1902 = vmatprep.subr.mxu0 0.0
        %1903 = vmatpush1.msra.mxu0 0.0
        %1904 = vmatprep.subr.mxu0 0.0
        %1905 = vmatpush1.msra.mxu0 0.0
        %1906 = vmatprep.subr.mxu0 0.0
        %1907 = vmatpush1.msra.mxu0 0.0
        %1908 = vmatprep.subr.mxu0 0.0
        %1909 = vmatpush1.msra.mxu0 0.0
        %1910 = vmatprep.subr.mxu0 0.0
        %1911 = vmatpush1.msra.mxu0 0.0
        %1912 = vmatprep.subr.mxu0 0.0
        %1913 = vmatpush1.msra.mxu0 0.0
        %1914 = vmatprep.subr.mxu0 0.0
        %1915 = vmatpush1.msra.mxu0 0.0
        %1916 = vmatprep.subr.mxu0 0.0
        %1917 = vmatpush1.msra.mxu0 0.0
        %1918 = vmatprep.subr.mxu0 0.0
        %1919 = vmatpush1.msra.mxu0 0.0
        %1920 = vmatprep.subr.mxu0 0.0
        %1921 = vmatpush1.msra.mxu0 0.0
        %1922 = vmatprep.subr.mxu0 0.0
        %1923 = vmatpush1.msra.mxu0 0.0
        %1924 = vmatprep.subr.mxu0 0.0
        %1925 = vmatpush1.msra.mxu0 0.0
        %1926 = vmatprep.subr.mxu0 0.0
        %1927 = vmatpush1.msra.mxu0 0.0
        %1928 = vmatprep.subr.mxu0 0.0
        %1929 = vmatpush1.msra.mxu0 0.0
        %1930 = vmatprep.subr.mxu0 0.0
        %1931 = vmatpush1.msra.mxu0 0.0
        %1932 = vmatprep.subr.mxu0 0.0
        %1933 = vmatpush1.msra.mxu0 0.0
        %1934 = vmatprep.subr.mxu0 0.0
        %1935 = vmatpush1.msra.mxu0 0.0
        %1936 = vmatprep.subr.mxu0 0.0
        %1937 = vmatpush1.msra.mxu0 0.0
        %1938 = vmatprep.subr.mxu0 0.0
        %1939 = vmatpush1.msra.mxu0 0.0
        %1940 = vmatprep.subr.mxu0 0.0
        %1941 = vmatpush1.msra.mxu0 0.0
        %1942 = vmatprep.subr.mxu0 0.0
        %1943 = vmatpush1.msra.mxu0 0.0
        %1944 = vmatprep.subr.mxu0 0.0
        %1945 = vmatpush1.msra.mxu0 0.0
        %1946 = vmatprep.subr.mxu0 0.0
        %1947 = vmatpush1.msra.mxu0 0.0
        %1948 = vmatprep.subr.mxu0 0.0
        %1949 = vmatpush1.msra.mxu0 0.0
        %1950 = vmatprep.subr.mxu0 0.0
        %1951 = vmatpush1.msra.mxu0 0.0
        %1952 = vmatprep.subr.mxu0 0.0
        %1953 = vmatpush1.msra.mxu0 0.0
        %1954 = vmatprep.subr.mxu0 0.0
        %1955 = vmatpush1.msra.mxu0 0.0
        %1956 = vmatprep.mubr.f32.mxu0 0.0
        %1957 = vmatmul.mubr.f32.gmra.mrb[0].mxu0 %v1890
        %v1958 = vpop.f32.mrb[0].mxu0
        %v1959 = vadd.f32 0.0, %v1958
        %v1960 = vpop.f32.mrb[0].mxu0
        %1961 = vdwg.mxu0
        %v1963 = vsel %vm1158, %v1732, 0
        %1965 = vmatprep.subr.mxu0 0.0
        %1966 = vmatpush1.msra.mxu0 %v1812
        %1967 = vmatprep.subr.mxu0 0.0
        %1968 = vmatpush1.msra.mxu0 %v1813
        %1969 = vmatprep.subr.mxu0 0.0
        %1970 = vmatpush1.msra.mxu0 0.0
        %1971 = vmatprep.subr.mxu0 0.0
        %1972 = vmatpush1.msra.mxu0 0.0
        %1973 = vmatprep.subr.mxu0 0.0
        %1974 = vmatpush1.msra.mxu0 0.0
        %1975 = vmatprep.subr.mxu0 0.0
        %1976 = vmatpush1.msra.mxu0 0.0
        %1977 = vmatprep.subr.mxu0 0.0
        %1978 = vmatpush1.msra.mxu0 0.0
        %1979 = vmatprep.subr.mxu0 0.0
        %1980 = vmatpush1.msra.mxu0 0.0
        %1981 = vmatprep.subr.mxu0 0.0
        %1982 = vmatpush1.msra.mxu0 0.0
        %1983 = vmatprep.subr.mxu0 0.0
        %1984 = vmatpush1.msra.mxu0 0.0
        %1985 = vmatprep.subr.mxu0 0.0
        %1986 = vmatpush1.msra.mxu0 0.0
        %1987 = vmatprep.subr.mxu0 0.0
        %1988 = vmatpush1.msra.mxu0 0.0
        %1989 = vmatprep.subr.mxu0 0.0
        %1990 = vmatpush1.msra.mxu0 0.0
        %1991 = vmatprep.subr.mxu0 0.0
        %1992 = vmatpush1.msra.mxu0 0.0
        %1993 = vmatprep.subr.mxu0 0.0
        %1994 = vmatpush1.msra.mxu0 0.0
        %1995 = vmatprep.subr.mxu0 0.0
        %1996 = vmatpush1.msra.mxu0 0.0
        %1997 = vmatprep.subr.mxu0 0.0
        %1998 = vmatpush1.msra.mxu0 0.0
        %1999 = vmatprep.subr.mxu0 0.0
        %2000 = vmatpush1.msra.mxu0 0.0
        %2001 = vmatprep.subr.mxu0 0.0
        %2002 = vmatpush1.msra.mxu0 0.0
        %2003 = vmatprep.subr.mxu0 0.0
        %2004 = vmatpush1.msra.mxu0 0.0
        %2005 = vmatprep.subr.mxu0 0.0
        %2006 = vmatpush1.msra.mxu0 0.0
        %2007 = vmatprep.subr.mxu0 0.0
        %2008 = vmatpush1.msra.mxu0 0.0
        %2009 = vmatprep.subr.mxu0 0.0
        %2010 = vmatpush1.msra.mxu0 0.0
        %2011 = vmatprep.subr.mxu0 0.0
        %2012 = vmatpush1.msra.mxu0 0.0
        %2013 = vmatprep.subr.mxu0 0.0
        %2014 = vmatpush1.msra.mxu0 0.0
        %2015 = vmatprep.subr.mxu0 0.0
        %2016 = vmatpush1.msra.mxu0 0.0
        %2017 = vmatprep.subr.mxu0 0.0
        %2018 = vmatpush1.msra.mxu0 0.0
        %2019 = vmatprep.subr.mxu0 0.0
        %2020 = vmatpush1.msra.mxu0 0.0
        %2021 = vmatprep.subr.mxu0 0.0
        %2022 = vmatpush1.msra.mxu0 0.0
        %2023 = vmatprep.subr.mxu0 0.0
        %2024 = vmatpush1.msra.mxu0 0.0
        %2025 = vmatprep.subr.mxu0 0.0
        %2026 = vmatpush1.msra.mxu0 0.0
        %2027 = vmatprep.subr.mxu0 0.0
        %2028 = vmatpush1.msra.mxu0 0.0
        %2029 = vmatprep.mubr.f32.mxu0 0.0
        %2030 = vmatmul.mubr.f32.gmra.mrb[0].mxu0 %v1963
        %v2031 = vpop.f32.mrb[0].mxu0
        %v2032 = vadd.f32 0.0, %v2031
        %v2033 = vpop.f32.mrb[0].mxu0
        %2034 = vdwg.mxu0
        %v2036 = vsel %vm1158, %v1805, 0
        %2038 = vmatprep.subr.mxu0 0.0
        %2039 = vmatpush1.msra.mxu0 %v1814
        %2040 = vmatprep.subr.mxu0 0.0
        %2041 = vmatpush1.msra.mxu0 %v1815
        %2042 = vmatprep.subr.mxu0 0.0
        %2043 = vmatpush1.msra.mxu0 0.0
        %2044 = vmatprep.subr.mxu0 0.0
        %2045 = vmatpush1.msra.mxu0 0.0
        %2046 = vmatprep.subr.mxu0 0.0
        %2047 = vmatpush1.msra.mxu0 0.0
        %2048 = vmatprep.subr.mxu0 0.0
        %2049 = vmatpush1.msra.mxu0 0.0
        %2050 = vmatprep.subr.mxu0 0.0
        %2051 = vmatpush1.msra.mxu0 0.0
        %2052 = vmatprep.subr.mxu0 0.0
        %2053 = vmatpush1.msra.mxu0 0.0
        %2054 = vmatprep.subr.mxu0 0.0
        %2055 = vmatpush1.msra.mxu0 0.0
        %2056 = vmatprep.subr.mxu0 0.0
        %2057 = vmatpush1.msra.mxu0 0.0
        %2058 = vmatprep.subr.mxu0 0.0
        %2059 = vmatpush1.msra.mxu0 0.0
        %2060 = vmatprep.subr.mxu0 0.0
        %2061 = vmatpush1.msra.mxu0 0.0
        %2062 = vmatprep.subr.mxu0 0.0
        %2063 = vmatpush1.msra.mxu0 0.0
        %2064 = vmatprep.subr.mxu0 0.0
        %2065 = vmatpush1.msra.mxu0 0.0
        %2066 = vmatprep.subr.mxu0 0.0
        %2067 = vmatpush1.msra.mxu0 0.0
        %2068 = vmatprep.subr.mxu0 0.0
        %2069 = vmatpush1.msra.mxu0 0.0
        %2070 = vmatprep.subr.mxu0 0.0
        %2071 = vmatpush1.msra.mxu0 0.0
        %2072 = vmatprep.subr.mxu0 0.0
        %2073 = vmatpush1.msra.mxu0 0.0
        %2074 = vmatprep.subr.mxu0 0.0
        %2075 = vmatpush1.msra.mxu0 0.0
        %2076 = vmatprep.subr.mxu0 0.0
        %2077 = vmatpush1.msra.mxu0 0.0
        %2078 = vmatprep.subr.mxu0 0.0
        %2079 = vmatpush1.msra.mxu0 0.0
        %2080 = vmatprep.subr.mxu0 0.0
        %2081 = vmatpush1.msra.mxu0 0.0
        %2082 = vmatprep.subr.mxu0 0.0
        %2083 = vmatpush1.msra.mxu0 0.0
        %2084 = vmatprep.subr.mxu0 0.0
        %2085 = vmatpush1.msra.mxu0 0.0
        %2086 = vmatprep.subr.mxu0 0.0
        %2087 = vmatpush1.msra.mxu0 0.0
        %2088 = vmatprep.subr.mxu0 0.0
        %2089 = vmatpush1.msra.mxu0 0.0
        %2090 = vmatprep.subr.mxu0 0.0
        %2091 = vmatpush1.msra.mxu0 0.0
        %2092 = vmatprep.subr.mxu0 0.0
        %2093 = vmatpush1.msra.mxu0 0.0
        %2094 = vmatprep.subr.mxu0 0.0
        %2095 = vmatpush1.msra.mxu0 0.0
        %2096 = vmatprep.subr.mxu0 0.0
        %2097 = vmatpush1.msra.mxu0 0.0
        %2098 = vmatprep.subr.mxu0 0.0
        %2099 = vmatpush1.msra.mxu0 0.0
        %2100 = vmatprep.subr.mxu0 0.0
        %2101 = vmatpush1.msra.mxu0 0.0
        %2102 = vmatprep.mubr.f32.mxu0 0.0
        %2103 = vmatmul.mubr.f32.gmra.mrb[0].mxu0 %v2036
        %v2104 = vpop.f32.mrb[0].mxu0
        %v2105 = vadd.f32 0.0, %v2104
        %v2106 = vpop.f32.mrb[0].mxu0
        %2107 = vdwg.mxu0
        %v2108 = vsel %vm314, %v1886, 0.0
        %v2109 = vsel %vm314, %v1959, 0.0
        %v2110 = vadd.f32 %v2108, %v2109
        %v2111 = vsel %vm314, %v2032, 0.0
        %v2112 = vadd.f32 %v2110, %v2111
        %v2113 = vsel %vm314, %v2105, 0.0
        %v2114 = vadd.f32 %v2112, %v2113
        %v2115 = vld [vmem:[%s3] sm:$0x1]
        %v2117 = vlaneseq
        %v2118 = vshrl.u32 %v2117, 7
        %v2119 = vsub.s32 0, %v2118
        %v2120 = vrot.slane %v2115, %v2119
        %v2122 = vadd.f32 %v2114, %v2120
        %2123 = vst.msk [vmem:[%s246] sm:$0xff] %vm314, %v2122
        %s2124 = sand.u32 %s121, 1
        %s2125 = scalar_lea.sflag [#allocation3], %s2124
        %s2126 = sand.u32 %s121, 1
        %s2127 = smul.addr %s2126, 8
        %s2128 = scalar_lea.vmem [#allocation2], %s2127
        %s2129 = sand.u32 %s24, 1
        %s2130 = scalar_lea.sflag [#allocation5], %s2129
        %s2131 = sand.u32 %s147, 1
        %s2132 = smul.addr %s2131, 32
        %s2133 = scalar_lea.vmem [#allocation4], %s2132
        %s2134 = sand.u32 %s24, 1
        %s2135 = scalar_lea.sflag [#allocation5], %s2134
        %s2136 = sand.u32 %s173, 1
        %s2137 = smul.addr %s2136, 32
        %s2138 = scalar_lea.vmem [#allocation6], %s2137
        // Predicated region
        $region37: #{tpu_custom_call.1} parent=35 // pred_check
          %p2139 = pneg %p131
        $region38: #{tpu_custom_call.1} parent=35 // pred_check_branch
          %2141 = sbr.rel (%p2139) target = $region40
        $region39: #{tpu_custom_call.1} parent=35 // pred_region
          %s2143 = ssub.s32 128, 128
          %2144 = vsyncadd %s2125, %s2143
          %s2145 = smul.addr %s24, 128
          %s2146 = scalar_lea.hbm %s4, %s2145
          %s2148 = sshll.u32 %s2128, 4
          %s2149 = int_to_ptr.vmem [resolvable:$true] %s2148
          %2151 = dma.vmem_to_hbm [thread:$0]  %s2149, 128, %s2146, %s2125
        $region40: #{tpu_custom_call.1} parent=35 // pred_fallthru
          _
        // Predicated region
        $region41: #{tpu_custom_call.1} parent=35 // pred_check
          %p2152 = pneg %p157
        $region42: #{tpu_custom_call.1} parent=35 // pred_check_branch
          %2154 = sbr.rel (%p2152) target = $region44
        $region43: #{tpu_custom_call.1} parent=35 // pred_region
          %s2156 = ssub.s32 512, 512
          %2157 = vsyncadd %s2130, %s2156
          %s2158 = smul.addr %s24, 4
          %s2159 = smul.addr %s2158, 128
          %s2160 = scalar_lea.hbm %s5, %s2159
          %s2161 = sshll.u32 %s2133, 4
          %s2162 = int_to_ptr.vmem [resolvable:$true] %s2161
          %2167 = dma.vmem_to_hbm [thread:$0]  %s2162, 512, %s2160, %s2130, 128, 128, 8
        $region44: #{tpu_custom_call.1} parent=35 // pred_fallthru
          _
        // Predicated region
        $region45: #{tpu_custom_call.1} parent=35 // pred_check
          %p2168 = pneg %p183
        $region46: #{tpu_custom_call.1} parent=35 // pred_check_branch
          %2170 = sbr.rel (%p2168) target = $region48
        $region47: #{tpu_custom_call.1} parent=35 // pred_region
          %s2172 = ssub.s32 512, 512
          %2173 = vsyncadd %s2135, %s2172
          %s2174 = smul.addr %s24, 4
          %s2175 = smul.addr %s2174, 128
          %s2176 = scalar_lea.hbm %s6, %s2175
          %s2177 = sshll.u32 %s2138, 4
          %s2178 = int_to_ptr.vmem [resolvable:$true] %s2177
          %2183 = dma.vmem_to_hbm [thread:$0]  %s2178, 512, %s2176, %s2135, 128, 128, 8
        $region48: #{tpu_custom_call.1} parent=35 // pred_fallthru
          _
      $region36: #{tpu_custom_call.1} parent=5 // pred_fallthru
        _
      %p2184 = scmp.le.s32.totalorder 2, %s19
      // Predicated region
      $region49: #{tpu_custom_call.1} parent=5 // pred_check
        %p2185 = pneg %p2184
      $region50: #{tpu_custom_call.1} parent=5 // pred_check_branch
        %2187 = sbr.rel (%p2185) target = $region52
      $region51: #{tpu_custom_call.1} parent=5 // pred_region
        %s2188 = ssub.s32 %s19, 2
        // Predicated region
        $region53: #{tpu_custom_call.1} parent=51 // pred_check
          %p2189 = pneg %p137
        $region54: #{tpu_custom_call.1} parent=51 // pred_check_branch
          %2191 = sbr.rel (%p2189) target = $region56
        $region55: #{tpu_custom_call.1} parent=51 // pred_region
          %s2192 = sand.u32 %s122, 1
          %s2193 = scalar_lea.sflag [#allocation3], %s2192
          %s2194 = sand.u32 %s122, 1
          %s2195 = smul.addr %s2194, 8
          %s2196 = scalar_lea.vmem [#allocation2], %s2195
          %2197 = dma.done %s2193, 128
        $region56: #{tpu_custom_call.1} parent=51 // pred_fallthru
          _
        // Predicated region
        $region57: #{tpu_custom_call.1} parent=51 // pred_check
          %p2198 = pneg %p163
        $region58: #{tpu_custom_call.1} parent=51 // pred_check_branch
          %2200 = sbr.rel (%p2198) target = $region60
        $region59: #{tpu_custom_call.1} parent=51 // pred_region
          %s2201 = sand.u32 %s25, 1
          %s2202 = scalar_lea.sflag [#allocation5], %s2201
          %s2203 = sand.u32 %s148, 1
          %s2204 = smul.addr %s2203, 32
          %s2205 = scalar_lea.vmem [#allocation4], %s2204
          %2206 = dma.done %s2202, 512
        $region60: #{tpu_custom_call.1} parent=51 // pred_fallthru
          _
        // Predicated region
        $region61: #{tpu_custom_call.1} parent=51 // pred_check
          %p2207 = pneg %p189
        $region62: #{tpu_custom_call.1} parent=51 // pred_check_branch
          %2209 = sbr.rel (%p2207) target = $region64
        $region63: #{tpu_custom_call.1} parent=51 // pred_region
          %s2210 = sand.u32 %s25, 1
          %s2211 = scalar_lea.sflag [#allocation5], %s2210
          %s2212 = sand.u32 %s174, 1
          %s2213 = smul.addr %s2212, 32
          %s2214 = scalar_lea.vmem [#allocation6], %s2213
          %2215 = dma.done %s2211, 512
        $region64: #{tpu_custom_call.1} parent=51 // pred_fallthru
          _
      $region52: #{tpu_custom_call.1} parent=5 // pred_fallthru
        _
    $region6: #{tpu_custom_call.1} parent=1 // loop_footer
      %s23 = sadd.s32 1, %s19
    $region7: #{tpu_custom_call.1} parent=1 // loop_footer_branch
      %18 = sbr.rel target = $region3
    $region8: #{tpu_custom_call.1} parent=1 // loop_exit
      _
    %2216 = vsyncpa [#allocation3], 1
    %s2217 = scalar_lea.sflag [#allocation3], 1
    %2218 = vsyncpa %s2217, 1
    %2219 = vsyncpa [#allocation5], 1
    %s2220 = scalar_lea.sflag [#allocation5], 1
    %2221 = vsyncpa %s2220, 1

</llo_original>
